<compile_context>
chip_gen: v7x
topology: tpu7x:2x2x1
jax: 0.10.0
libtpu: 0.0.40
codegen_flags: <defaults>
</compile_context>

<pallas_src>
import functools
import math

import jax
import jax.numpy as jnp
from jax.experimental import pallas as pl
from jax.experimental.pallas import tpu as pltpu


# ----------------------------- configuration ------------------------------
class Configs:
    enc_in = 4
    seq_len = 16
    pred_len = 8
    d_model = 32
    d_ff = 2                    # decoder hidden = d_model * d_ff
    e_layers = 2
    down_sampling_layers = 2
    down_sampling_window = 2    # stride of the depthwise conv
    down_sampling_c = 0.5       # channel shrink factor per scale
    kernel_size = 3
    dropout = 0.1               # the reference forward re-applies GELU in the "drop" branch


# ------------------------------ in-kernel math -----------------------------
def _erf(x):
    # Abramowitz & Stegun 7.1.26 rational approximation (|err| < 1.5e-7),
    # built only from ops that lower cleanly on Mosaic (exp / mul / add / where).
    p = 0.3275911
    a1, a2, a3, a4, a5 = 0.254829592, -0.284496736, 1.421413741, -1.453152027, 1.061405429
    ax = jnp.abs(x)
    t = 1.0 / (1.0 + p * ax)
    poly = ((((a5 * t + a4) * t + a3) * t + a2) * t + a1) * t
    y = 1.0 - poly * jnp.exp(-ax * ax)
    return jnp.where(x < 0, -y, y)


def _gelu(x):
    # exact (erf-based) GELU, matching torch.nn.GELU() default
    return 0.5 * x * (1.0 + _erf(x * (1.0 / math.sqrt(2.0))))


# ------------------------------ fused kernel -------------------------------
def _fused_forward_kernel(*refs, e_layers, dsl, eps):
    """Whole forward hot path in a single kernel invocation (no grid).

    Ref order:
      xn, segM, emb_op, emb_bias,
      for each encoder: ln_g, ln_b, (aa_op_i, ji_op_i) * dsl,
      ln1_g, ln1_b, dec1_op, dec1_b, dec2_op, dec2_b,
      out
    """
    it = iter(refs)
    xn_ref = next(it)          # [B, C0*seq_len]
    segM_ref = next(it)        # [C0*T, C0*T] segment-averaging operator
    emb_w_ref = next(it)       # [C0*seq_len, C0*T]  block-diag embedding
    emb_b_ref = next(it)       # [1, C0*T]  bias (+ W_pos folded in)
    encs = []
    for _ in range(e_layers):
        ln_g = next(it)
        ln_b = next(it)
        ops = [(next(it), next(it)) for _ in range(dsl)]
        encs.append((ln_g, ln_b, ops))
    ln1_g = next(it)
    ln1_b = next(it)
    d1_w = next(it)
    d1_b = next(it)
    d2_w = next(it)
    d2_b = next(it)
    out_ref = next(it)

    M = segM_ref[...]

    def seg_layernorm(x, g, b):
        # Per-(batch, channel) LayerNorm over each d_model segment, expressed
        # as two tiny MXU matmuls against the segment-averaging operator M
        # (avoids any in-kernel reshape / cross-lane reduction).
        mu = jnp.dot(x, M, preferred_element_type=jnp.float32)
        xc = x - mu
        var = jnp.dot(xc * xc, M, preferred_element_type=jnp.float32)
        return xc * jax.lax.rsqrt(var + eps) * g + b

    # embedding Linear(seq_len, d_model) applied per (b, c)  (+ W_pos bias)
    x = jnp.dot(xn_ref[...], emb_w_ref[...],
                preferred_element_type=jnp.float32) + emb_b_ref[...]

    # MultiScaleEncoder stack, with residual connections
    for ln_g, ln_b, ops in encs:
        x_ln = seg_layernorm(x, ln_g[...], ln_b[...])
        cur = x_ln
        fused = None
        for op_ref, ji_ref in ops:
            # CombinedAntiAlias: antialias filter + DWConv + PWConv folded into
            # one matmul, GELU act branch + GELU "drop" branch (the reference
            # forward applies self.act twice).
            down = _gelu(_gelu(jnp.dot(cur, op_ref[...],
                                       preferred_element_type=jnp.float32)))
            # joint_interpolation, with softmax(fusion_weights) pre-folded in,
            # so the pyramid combine is a plain accumulate.
            term = jnp.dot(down, ji_ref[...], preferred_element_type=jnp.float32)
            fused = term if fused is None else fused + term
            cur = down
        x = fused + x

    # decoder head: LayerNorm -> Linear+LeakyReLU -> Linear
    feats = seg_layernorm(x, ln1_g[...], ln1_b[...])
    h = jnp.dot(feats, d1_w[...], preferred_element_type=jnp.float32) + d1_b[...]
    h = jnp.where(h >= 0, h, 0.01 * h)            # nn.LeakyReLU() default slope
    out = jnp.dot(h, d2_w[...], preferred_element_type=jnp.float32) + d2_b[...]
    out_ref[...] = out.astype(out_ref.dtype)


# ------------------- operator construction (setup-time glue) ---------------
# TODO(synk): Pallas has no FFT primitive; rfft/irfft pipelines are folded into
# exact dense linear operators here (valid because all lengths are static).
def _antialias_matrix(L, icr):
    # x_filtered[t] = sum_s x[s] * A[s, t]  (rfft(ortho) -> low-pass mask -> irfft(ortho))
    F = L // 2 + 1
    nyq = int(F * (icr / 2.0))
    eye = jnp.eye(L, dtype=jnp.float32)
    xf = jnp.fft.rfft(eye, axis=-1, norm="ortho")
    mask = jnp.zeros((F,), jnp.float32).at[:nyq].set(1.0)
    return jnp.fft.irfft(xf * mask, n=L, axis=-1, norm="ortho")          # [L_in, L_out]


def _dwconv_matrix(w_dw, L, stride, pad):
    # depthwise Conv1d (groups=C, no bias) as per-channel matrix D[c, s_in, t_out]
    C, k = w_dw.shape
    L_out = (L + 2 * pad - k) // stride + 1
    D = jnp.zeros((C, L, L_out), jnp.float32)
    for t in range(L_out):
        for j in range(k):
            s = t * stride - pad + j
            if 0 <= s < L:
                D = D.at[:, s, t].add(w_dw[:, j])
    return D


def _aa_layer_operator(w_dw, w_pw, L, icr, stride, pad):
    # Full CombinedAntiAlias (pre-activation): [C_in*L_in, C_out*L_out]
    A = _antialias_matrix(L, icr)                     # [L, L]
    D = _dwconv_matrix(w_dw, L, stride, pad)          # [C_in, L, L_out]
    M = jnp.einsum("sm,cmt->cst", A, D)               # antialias then DWConv
    T = jnp.einsum("oc,cst->csot", w_pw, M)           # then PWConv (1x1, no bias)
    C_in, _, C_out, L_out = T.shape
    return T.reshape(C_in * L, C_out * L_out).astype(jnp.float32), (C_out, L_out)


def _joint_interp_operator(w_i, L_in, T_len):
    # joint_interpolation as a matrix [C*L_in, enc_in*T_len]
    # (rfft -> einsum with rfft(w, ortho) -> zero-pad spectrum -> irfft(n=T_len))
    # TODO(synk): the PyTorch code writes complex values into a real zeros tensor
    # (would raise); implemented here as the intended complex zero-padding.
    O, C, _ = w_i.shape
    basis = jnp.eye(C * L_in, dtype=jnp.float32).reshape(C * L_in, C, L_in)
    x_fft = jnp.fft.rfft(basis, axis=-1)
    w_fft = jnp.fft.rfft(w_i, axis=-1, norm="ortho")
    exp_fft = jnp.einsum("bcf,ocf->bof", x_fft, w_fft)
    F_t = T_len // 2 + 1
    out_fft = jnp.zeros((C * L_in, O, F_t), exp_fft.dtype)
    out_fft = out_fft.at[..., : exp_fft.shape[-1]].set(exp_fft)
    out = jnp.fft.irfft(out_fft, n=T_len, axis=-1)
    return out.reshape(C * L_in, O * T_len).astype(jnp.float32)


# ------------------------------- parameters --------------------------------
def init_params(cfg, key):
    keys = iter(jax.random.split(key, 64))
    p = {}
    C0, T = cfg.enc_in, cfg.d_model

    # RevIN (affine=True, default init)
    p["revin_w"] = jnp.ones((C0,), jnp.float32)
    p["revin_b"] = jnp.zeros((C0,), jnp.float32)

    eyeC = jnp.eye(C0, dtype=jnp.float32)
    tile = lambda v: jnp.tile(v.astype(jnp.float32), (C0,)).reshape(1, -1)

    # embedding: Linear(seq_len, d_model) + W_pos (folded into the tiled bias)
    emb_w = jax.random.normal(next(keys), (cfg.seq_len, T)) * 0.02
    emb_b = jax.random.normal(next(keys), (T,)) * 0.02
    w_pos = jax.random.uniform(next(keys), (T,), minval=-0.02, maxval=0.02)

    segM = jnp.kron(eyeC, jnp.ones((T, T), jnp.float32) / T)       # [C0*T, C0*T]
    kern = [segM,
            jnp.kron(eyeC, emb_w).astype(jnp.float32),             # block-diag embedding
            tile(emb_b + w_pos)]

    pad = (cfg.kernel_size - 1) // 2
    for _ in range(cfg.e_layers):
        ln_g = jnp.ones((T,), jnp.float32)
        ln_b = jnp.zeros((T,), jnp.float32)
        kern += [tile(ln_g), tile(ln_b)]
        # fusion_weights init = ones -> fold softmax into the ji operators
        fusion_w = jax.nn.softmax(jnp.ones((cfg.down_sampling_layers,), jnp.float32))
        cur_c, cur_len = C0, T
        for i in range(cfg.down_sampling_layers):
            out_c = max(1, int(cur_c * cfg.down_sampling_c))
            icr = min(out_c / cur_c, cfg.kernel_size) / cfg.down_sampling_window
            w_dw = jax.random.normal(next(keys), (cur_c, cfg.kernel_size)) * 0.1
            w_pw = jax.random.normal(next(keys), (out_c, cur_c)) * 0.1
            op, (oc, olen) = _aa_layer_operator(w_dw, w_pw, cur_len, icr,
                                                cfg.down_sampling_window, pad)
            # MultiScaleEncoder.weight[i]: (enc_in, enc_in*dsc^(i+1), d_model // dsw^(i+1))
            w_len = T // cfg.down_sampling_window ** (i + 1)
            w_ch = max(1, int(C0 * cfg.down_sampling_c ** (i + 1)))
            assert w_ch == oc and w_len == olen, "config inconsistent with weight shapes"
            w_i = jax.random.normal(next(keys), (C0, w_ch, w_len)) * 0.02
            ji = _joint_interp_operator(w_i, olen, T) * fusion_w[i]
            kern += [op, ji]
            cur_c, cur_len = oc, olen

    # decoder: LayerNorm -> Linear(d_model, hid) -> LeakyReLU -> Linear(hid, pred_len)
    hid = T * cfg.d_ff
    ln1_g = jnp.ones((T,), jnp.float32)
    ln1_b = jnp.zeros((T,), jnp.float32)
    dec1_w = jax.random.normal(next(keys), (T, hid)) * 0.02
    dec1_b = jax.random.normal(next(keys), (hid,)) * 0.02
    dec2_w = jax.random.normal(next(keys), (hid, cfg.pred_len)) * 0.02
    dec2_b = jax.random.normal(next(keys), (cfg.pred_len,)) * 0.02
    kern += [tile(ln1_g), tile(ln1_b),
             jnp.kron(eyeC, dec1_w).astype(jnp.float32), tile(dec1_b),
             jnp.kron(eyeC, dec2_w).astype(jnp.float32), tile(dec2_b)]

    p["kern"] = kern
    return p


# --------------------------------- forward ---------------------------------
def model_forward(p, cfg, x_enc):
    B, L, C = x_enc.shape
    # RevIN 'norm' (stats over time dim, unbiased=False, affine) — cheap XLA elementwise
    mean = jnp.mean(x_enc, axis=1, keepdims=True)
    stdev = jnp.sqrt(jnp.var(x_enc, axis=1, keepdims=True) + 1e-5)
    xn = (x_enc - mean) / stdev * p["revin_w"] + p["revin_b"]
    xn = jnp.transpose(xn, (0, 2, 1)).reshape(B, C * L)            # [B, C*seq_len]

    vmem = pl.BlockSpec(memory_space=pltpu.MemorySpace.VMEM)
    out = pl.pallas_call(
        functools.partial(_fused_forward_kernel,
                          e_layers=cfg.e_layers,
                          dsl=cfg.down_sampling_layers,
                          eps=1e-5),
        out_shape=jax.ShapeDtypeStruct((B, C * cfg.pred_len), jnp.float32),
        in_specs=[vmem] * (1 + len(p["kern"])),
        out_specs=vmem,
    )(xn, *p["kern"])                                              # [B, C*pred_len]

    out = jnp.transpose(out.reshape(B, C, cfg.pred_len), (0, 2, 1))  # [B, pred_len, C]
    # RevIN 'denorm'
    out = (out - p["revin_b"]) / (p["revin_w"] + 1e-5 * 1e-5)
    out = out * stdev + mean
    return out


# ----------------------------------- main -----------------------------------
if __name__ == "__main__":
    cfg = Configs()
    key = jax.random.PRNGKey(0)
    k_params, k_x = jax.random.split(key)
    params = init_params(cfg, k_params)

    x_enc = jax.random.normal(k_x, (2, cfg.seq_len, cfg.enc_in), jnp.float32)

    fwd = jax.jit(lambda x: model_forward(params, cfg, x))
    out = jax.block_until_ready(fwd(x_enc))

    assert out.shape == (2, cfg.pred_len, cfg.enc_in), out.shape
    assert bool(jnp.all(jnp.isfinite(out)))
    print("KERNEL_OK")
</pallas_src>

<mosaic_0001>
module attributes {stable_mosaic.version = 11 : i64} {
  func.func @_fused_forward_kernel(%arg0: memref<2x64xf32, #tpu.memory_space<vmem>>, %arg1: memref<128x128xf32, #tpu.memory_space<vmem>>, %arg2: memref<64x128xf32, #tpu.memory_space<vmem>>, %arg3: memref<1x128xf32, #tpu.memory_space<vmem>>, %arg4: memref<1x128xf32, #tpu.memory_space<vmem>>, %arg5: memref<1x128xf32, #tpu.memory_space<vmem>>, %arg6: memref<128x32xf32, #tpu.memory_space<vmem>>, %arg7: memref<32x128xf32, #tpu.memory_space<vmem>>, %arg8: memref<32x8xf32, #tpu.memory_space<vmem>>, %arg9: memref<8x128xf32, #tpu.memory_space<vmem>>, %arg10: memref<1x128xf32, #tpu.memory_space<vmem>>, %arg11: memref<1x128xf32, #tpu.memory_space<vmem>>, %arg12: memref<128x32xf32, #tpu.memory_space<vmem>>, %arg13: memref<32x128xf32, #tpu.memory_space<vmem>>, %arg14: memref<32x8xf32, #tpu.memory_space<vmem>>, %arg15: memref<8x128xf32, #tpu.memory_space<vmem>>, %arg16: memref<1x128xf32, #tpu.memory_space<vmem>>, %arg17: memref<1x128xf32, #tpu.memory_space<vmem>>, %arg18: memref<128x256xf32, #tpu.memory_space<vmem>>, %arg19: memref<1x256xf32, #tpu.memory_space<vmem>>, %arg20: memref<256x32xf32, #tpu.memory_space<vmem>>, %arg21: memref<1x32xf32, #tpu.memory_space<vmem>>, %arg22: memref<2x32xf32, #tpu.memory_space<vmem>>) attributes {dimension_semantics = [], scalar_prefetch = 0 : i64, scratch_operands = 0 : i64, tpu.core_type = #tpu.core_type<tc>} {
    %c0 = arith.constant 0 : index
    %c0_0 = arith.constant 0 : index
    %0 = vector.load %arg1[%c0, %c0_0] : memref<128x128xf32, #tpu.memory_space<vmem>>, vector<128x128xf32>
    %c0_1 = arith.constant 0 : index
    %c0_2 = arith.constant 0 : index
    %1 = vector.load %arg0[%c0_1, %c0_2] : memref<2x64xf32, #tpu.memory_space<vmem>>, vector<2x64xf32>
    %c0_3 = arith.constant 0 : index
    %c0_4 = arith.constant 0 : index
    %2 = vector.load %arg2[%c0_3, %c0_4] : memref<64x128xf32, #tpu.memory_space<vmem>>, vector<64x128xf32>
    %cst = arith.constant dense<0.000000e+00> : vector<2x128xf32>
    %3 = tpu.matmul %1, %2, %cst {dimension_numbers = #tpu.dot_dimension_numbers<[1], [0], [0], [1], [0, 0, 1, 1], [], []>} : vector<2x64xf32>, vector<64x128xf32>, vector<2x128xf32> -> vector<2x128xf32>
    %c0_5 = arith.constant 0 : index
    %c0_6 = arith.constant 0 : index
    %4 = vector.load %arg3[%c0_5, %c0_6] : memref<1x128xf32, #tpu.memory_space<vmem>>, vector<1x128xf32>
    %5 = vector.broadcast %4 : vector<1x128xf32> to vector<2x128xf32>
    %6 = arith.addf %3, %5 : vector<2x128xf32>
    %c0_7 = arith.constant 0 : index
    %c0_8 = arith.constant 0 : index
    %7 = vector.load %arg4[%c0_7, %c0_8] : memref<1x128xf32, #tpu.memory_space<vmem>>, vector<1x128xf32>
    %c0_9 = arith.constant 0 : index
    %c0_10 = arith.constant 0 : index
    %8 = vector.load %arg5[%c0_9, %c0_10] : memref<1x128xf32, #tpu.memory_space<vmem>>, vector<1x128xf32>
    %cst_11 = arith.constant dense<0.000000e+00> : vector<2x128xf32>
    %9 = tpu.matmul %6, %0, %cst_11 {dimension_numbers = #tpu.dot_dimension_numbers<[1], [0], [0], [1], [0, 0, 1, 1], [], []>} : vector<2x128xf32>, vector<128x128xf32>, vector<2x128xf32> -> vector<2x128xf32>
    %10 = arith.subf %6, %9 : vector<2x128xf32>
    %11 = arith.mulf %10, %10 : vector<2x128xf32>
    %cst_12 = arith.constant dense<0.000000e+00> : vector<2x128xf32>
    %12 = tpu.matmul %11, %0, %cst_12 {dimension_numbers = #tpu.dot_dimension_numbers<[1], [0], [0], [1], [0, 0, 1, 1], [], []>} : vector<2x128xf32>, vector<128x128xf32>, vector<2x128xf32> -> vector<2x128xf32>
    %cst_13 = arith.constant 9.99999974E-6 : f32
    %13 = vector.broadcast %cst_13 : f32 to vector<2x128xf32>
    %14 = arith.addf %12, %13 : vector<2x128xf32>
    %15 = math.rsqrt %14 : vector<2x128xf32>
    %16 = arith.mulf %10, %15 : vector<2x128xf32>
    %17 = vector.broadcast %7 : vector<1x128xf32> to vector<2x128xf32>
    %18 = arith.mulf %16, %17 : vector<2x128xf32>
    %19 = vector.broadcast %8 : vector<1x128xf32> to vector<2x128xf32>
    %20 = arith.addf %18, %19 : vector<2x128xf32>
    %c0_14 = arith.constant 0 : index
    %c0_15 = arith.constant 0 : index
    %21 = vector.load %arg6[%c0_14, %c0_15] : memref<128x32xf32, #tpu.memory_space<vmem>>, vector<128x32xf32>
    %cst_16 = arith.constant dense<0.000000e+00> : vector<2x32xf32>
    %22 = tpu.matmul %20, %21, %cst_16 {dimension_numbers = #tpu.dot_dimension_numbers<[1], [0], [0], [1], [0, 0, 1, 1], [], []>} : vector<2x128xf32>, vector<128x32xf32>, vector<2x32xf32> -> vector<2x32xf32>
    %cst_17 = arith.constant 5.000000e-01 : f32
    %23 = vector.broadcast %cst_17 : f32 to vector<2x32xf32>
    %24 = arith.mulf %23, %22 : vector<2x32xf32>
    %cst_18 = arith.constant 0.707106769 : f32
    %25 = vector.broadcast %cst_18 : f32 to vector<2x32xf32>
    %26 = arith.mulf %22, %25 : vector<2x32xf32>
    %27 = math.absf %26 : vector<2x32xf32>
    %cst_19 = arith.constant 0.327591091 : f32
    %28 = vector.broadcast %cst_19 : f32 to vector<2x32xf32>
    %29 = arith.mulf %28, %27 : vector<2x32xf32>
    %cst_20 = arith.constant 1.000000e+00 : f32
    %30 = vector.broadcast %cst_20 : f32 to vector<2x32xf32>
    %31 = arith.addf %30, %29 : vector<2x32xf32>
    %cst_21 = arith.constant 1.000000e+00 : f32
    %32 = vector.broadcast %cst_21 : f32 to vector<2x32xf32>
    %33 = arith.divf %32, %31 : vector<2x32xf32>
    %cst_22 = arith.constant 1.06140542 : f32
    %34 = vector.broadcast %cst_22 : f32 to vector<2x32xf32>
    %35 = arith.mulf %34, %33 : vector<2x32xf32>
    %cst_23 = arith.constant -1.45315206 : f32
    %36 = vector.broadcast %cst_23 : f32 to vector<2x32xf32>
    %37 = arith.addf %35, %36 : vector<2x32xf32>
    %38 = arith.mulf %37, %33 : vector<2x32xf32>
    %cst_24 = arith.constant 1.42141378 : f32
    %39 = vector.broadcast %cst_24 : f32 to vector<2x32xf32>
    %40 = arith.addf %38, %39 : vector<2x32xf32>
    %41 = arith.mulf %40, %33 : vector<2x32xf32>
    %cst_25 = arith.constant -0.284496725 : f32
    %42 = vector.broadcast %cst_25 : f32 to vector<2x32xf32>
    %43 = arith.addf %41, %42 : vector<2x32xf32>
    %44 = arith.mulf %43, %33 : vector<2x32xf32>
    %cst_26 = arith.constant 0.254829586 : f32
    %45 = vector.broadcast %cst_26 : f32 to vector<2x32xf32>
    %46 = arith.addf %44, %45 : vector<2x32xf32>
    %47 = arith.mulf %46, %33 : vector<2x32xf32>
    %cst_27 = arith.constant 0.000000e+00 : f32
    %48 = vector.broadcast %cst_27 : f32 to vector<2x32xf32>
    %49 = arith.subf %48, %27 : vector<2x32xf32>
    %50 = arith.mulf %49, %27 : vector<2x32xf32>
    %51 = math.exp %50 : vector<2x32xf32>
    %52 = arith.mulf %47, %51 : vector<2x32xf32>
    %cst_28 = arith.constant 1.000000e+00 : f32
    %53 = vector.broadcast %cst_28 : f32 to vector<2x32xf32>
    %54 = arith.subf %53, %52 : vector<2x32xf32>
    %cst_29 = arith.constant 0.000000e+00 : f32
    %55 = vector.broadcast %cst_29 : f32 to vector<2x32xf32>
    %56 = arith.cmpf olt, %26, %55 : vector<2x32xf32>
    %cst_30 = arith.constant 0.000000e+00 : f32
    %57 = vector.broadcast %cst_30 : f32 to vector<2x32xf32>
    %58 = arith.subf %57, %54 : vector<2x32xf32>
    %59 = arith.select %56, %58, %54 : vector<2x32xi1>, vector<2x32xf32>
    %cst_31 = arith.constant 1.000000e+00 : f32
    %60 = vector.broadcast %cst_31 : f32 to vector<2x32xf32>
    %61 = arith.addf %60, %59 : vector<2x32xf32>
    %62 = arith.mulf %24, %61 : vector<2x32xf32>
    %cst_32 = arith.constant 5.000000e-01 : f32
    %63 = vector.broadcast %cst_32 : f32 to vector<2x32xf32>
    %64 = arith.mulf %63, %62 : vector<2x32xf32>
    %cst_33 = arith.constant 0.707106769 : f32
    %65 = vector.broadcast %cst_33 : f32 to vector<2x32xf32>
    %66 = arith.mulf %62, %65 : vector<2x32xf32>
    %67 = math.absf %66 : vector<2x32xf32>
    %cst_34 = arith.constant 0.327591091 : f32
    %68 = vector.broadcast %cst_34 : f32 to vector<2x32xf32>
    %69 = arith.mulf %68, %67 : vector<2x32xf32>
    %cst_35 = arith.constant 1.000000e+00 : f32
    %70 = vector.broadcast %cst_35 : f32 to vector<2x32xf32>
    %71 = arith.addf %70, %69 : vector<2x32xf32>
    %cst_36 = arith.constant 1.000000e+00 : f32
    %72 = vector.broadcast %cst_36 : f32 to vector<2x32xf32>
    %73 = arith.divf %72, %71 : vector<2x32xf32>
    %cst_37 = arith.constant 1.06140542 : f32
    %74 = vector.broadcast %cst_37 : f32 to vector<2x32xf32>
    %75 = arith.mulf %74, %73 : vector<2x32xf32>
    %cst_38 = arith.constant -1.45315206 : f32
    %76 = vector.broadcast %cst_38 : f32 to vector<2x32xf32>
    %77 = arith.addf %75, %76 : vector<2x32xf32>
    %78 = arith.mulf %77, %73 : vector<2x32xf32>
    %cst_39 = arith.constant 1.42141378 : f32
    %79 = vector.broadcast %cst_39 : f32 to vector<2x32xf32>
    %80 = arith.addf %78, %79 : vector<2x32xf32>
    %81 = arith.mulf %80, %73 : vector<2x32xf32>
    %cst_40 = arith.constant -0.284496725 : f32
    %82 = vector.broadcast %cst_40 : f32 to vector<2x32xf32>
    %83 = arith.addf %81, %82 : vector<2x32xf32>
    %84 = arith.mulf %83, %73 : vector<2x32xf32>
    %cst_41 = arith.constant 0.254829586 : f32
    %85 = vector.broadcast %cst_41 : f32 to vector<2x32xf32>
    %86 = arith.addf %84, %85 : vector<2x32xf32>
    %87 = arith.mulf %86, %73 : vector<2x32xf32>
    %cst_42 = arith.constant 0.000000e+00 : f32
    %88 = vector.broadcast %cst_42 : f32 to vector<2x32xf32>
    %89 = arith.subf %88, %67 : vector<2x32xf32>
    %90 = arith.mulf %89, %67 : vector<2x32xf32>
    %91 = math.exp %90 : vector<2x32xf32>
    %92 = arith.mulf %87, %91 : vector<2x32xf32>
    %cst_43 = arith.constant 1.000000e+00 : f32
    %93 = vector.broadcast %cst_43 : f32 to vector<2x32xf32>
    %94 = arith.subf %93, %92 : vector<2x32xf32>
    %cst_44 = arith.constant 0.000000e+00 : f32
    %95 = vector.broadcast %cst_44 : f32 to vector<2x32xf32>
    %96 = arith.cmpf olt, %66, %95 : vector<2x32xf32>
    %cst_45 = arith.constant 0.000000e+00 : f32
    %97 = vector.broadcast %cst_45 : f32 to vector<2x32xf32>
    %98 = arith.subf %97, %94 : vector<2x32xf32>
    %99 = arith.select %96, %98, %94 : vector<2x32xi1>, vector<2x32xf32>
    %cst_46 = arith.constant 1.000000e+00 : f32
    %100 = vector.broadcast %cst_46 : f32 to vector<2x32xf32>
    %101 = arith.addf %100, %99 : vector<2x32xf32>
    %102 = arith.mulf %64, %101 : vector<2x32xf32>
    %c0_47 = arith.constant 0 : index
    %c0_48 = arith.constant 0 : index
    %103 = vector.load %arg7[%c0_47, %c0_48] : memref<32x128xf32, #tpu.memory_space<vmem>>, vector<32x128xf32>
    %cst_49 = arith.constant dense<0.000000e+00> : vector<2x128xf32>
    %104 = tpu.matmul %102, %103, %cst_49 {dimension_numbers = #tpu.dot_dimension_numbers<[1], [0], [0], [1], [0, 0, 1, 1], [], []>} : vector<2x32xf32>, vector<32x128xf32>, vector<2x128xf32> -> vector<2x128xf32>
    %c0_50 = arith.constant 0 : index
    %c0_51 = arith.constant 0 : index
    %105 = vector.load %arg8[%c0_50, %c0_51] : memref<32x8xf32, #tpu.memory_space<vmem>>, vector<32x8xf32>
    %cst_52 = arith.constant dense<0.000000e+00> : vector<2x8xf32>
    %106 = tpu.matmul %102, %105, %cst_52 {dimension_numbers = #tpu.dot_dimension_numbers<[1], [0], [0], [1], [0, 0, 1, 1], [], []>} : vector<2x32xf32>, vector<32x8xf32>, vector<2x8xf32> -> vector<2x8xf32>
    %cst_53 = arith.constant 5.000000e-01 : f32
    %107 = vector.broadcast %cst_53 : f32 to vector<2x8xf32>
    %108 = arith.mulf %107, %106 : vector<2x8xf32>
    %cst_54 = arith.constant 0.707106769 : f32
    %109 = vector.broadcast %cst_54 : f32 to vector<2x8xf32>
    %110 = arith.mulf %106, %109 : vector<2x8xf32>
    %111 = math.absf %110 : vector<2x8xf32>
    %cst_55 = arith.constant 0.327591091 : f32
    %112 = vector.broadcast %cst_55 : f32 to vector<2x8xf32>
    %113 = arith.mulf %112, %111 : vector<2x8xf32>
    %cst_56 = arith.constant 1.000000e+00 : f32
    %114 = vector.broadcast %cst_56 : f32 to vector<2x8xf32>
    %115 = arith.addf %114, %113 : vector<2x8xf32>
    %cst_57 = arith.constant 1.000000e+00 : f32
    %116 = vector.broadcast %cst_57 : f32 to vector<2x8xf32>
    %117 = arith.divf %116, %115 : vector<2x8xf32>
    %cst_58 = arith.constant 1.06140542 : f32
    %118 = vector.broadcast %cst_58 : f32 to vector<2x8xf32>
    %119 = arith.mulf %118, %117 : vector<2x8xf32>
    %cst_59 = arith.constant -1.45315206 : f32
    %120 = vector.broadcast %cst_59 : f32 to vector<2x8xf32>
    %121 = arith.addf %119, %120 : vector<2x8xf32>
    %122 = arith.mulf %121, %117 : vector<2x8xf32>
    %cst_60 = arith.constant 1.42141378 : f32
    %123 = vector.broadcast %cst_60 : f32 to vector<2x8xf32>
    %124 = arith.addf %122, %123 : vector<2x8xf32>
    %125 = arith.mulf %124, %117 : vector<2x8xf32>
    %cst_61 = arith.constant -0.284496725 : f32
    %126 = vector.broadcast %cst_61 : f32 to vector<2x8xf32>
    %127 = arith.addf %125, %126 : vector<2x8xf32>
    %128 = arith.mulf %127, %117 : vector<2x8xf32>
    %cst_62 = arith.constant 0.254829586 : f32
    %129 = vector.broadcast %cst_62 : f32 to vector<2x8xf32>
    %130 = arith.addf %128, %129 : vector<2x8xf32>
    %131 = arith.mulf %130, %117 : vector<2x8xf32>
    %cst_63 = arith.constant 0.000000e+00 : f32
    %132 = vector.broadcast %cst_63 : f32 to vector<2x8xf32>
    %133 = arith.subf %132, %111 : vector<2x8xf32>
    %134 = arith.mulf %133, %111 : vector<2x8xf32>
    %135 = math.exp %134 : vector<2x8xf32>
    %136 = arith.mulf %131, %135 : vector<2x8xf32>
    %cst_64 = arith.constant 1.000000e+00 : f32
    %137 = vector.broadcast %cst_64 : f32 to vector<2x8xf32>
    %138 = arith.subf %137, %136 : vector<2x8xf32>
    %cst_65 = arith.constant 0.000000e+00 : f32
    %139 = vector.broadcast %cst_65 : f32 to vector<2x8xf32>
    %140 = arith.cmpf olt, %110, %139 : vector<2x8xf32>
    %cst_66 = arith.constant 0.000000e+00 : f32
    %141 = vector.broadcast %cst_66 : f32 to vector<2x8xf32>
    %142 = arith.subf %141, %138 : vector<2x8xf32>
    %143 = arith.select %140, %142, %138 : vector<2x8xi1>, vector<2x8xf32>
    %cst_67 = arith.constant 1.000000e+00 : f32
    %144 = vector.broadcast %cst_67 : f32 to vector<2x8xf32>
    %145 = arith.addf %144, %143 : vector<2x8xf32>
    %146 = arith.mulf %108, %145 : vector<2x8xf32>
    %cst_68 = arith.constant 5.000000e-01 : f32
    %147 = vector.broadcast %cst_68 : f32 to vector<2x8xf32>
    %148 = arith.mulf %147, %146 : vector<2x8xf32>
    %cst_69 = arith.constant 0.707106769 : f32
    %149 = vector.broadcast %cst_69 : f32 to vector<2x8xf32>
    %150 = arith.mulf %146, %149 : vector<2x8xf32>
    %151 = math.absf %150 : vector<2x8xf32>
    %cst_70 = arith.constant 0.327591091 : f32
    %152 = vector.broadcast %cst_70 : f32 to vector<2x8xf32>
    %153 = arith.mulf %152, %151 : vector<2x8xf32>
    %cst_71 = arith.constant 1.000000e+00 : f32
    %154 = vector.broadcast %cst_71 : f32 to vector<2x8xf32>
    %155 = arith.addf %154, %153 : vector<2x8xf32>
    %cst_72 = arith.constant 1.000000e+00 : f32
    %156 = vector.broadcast %cst_72 : f32 to vector<2x8xf32>
    %157 = arith.divf %156, %155 : vector<2x8xf32>
    %cst_73 = arith.constant 1.06140542 : f32
    %158 = vector.broadcast %cst_73 : f32 to vector<2x8xf32>
    %159 = arith.mulf %158, %157 : vector<2x8xf32>
    %cst_74 = arith.constant -1.45315206 : f32
    %160 = vector.broadcast %cst_74 : f32 to vector<2x8xf32>
    %161 = arith.addf %159, %160 : vector<2x8xf32>
    %162 = arith.mulf %161, %157 : vector<2x8xf32>
    %cst_75 = arith.constant 1.42141378 : f32
    %163 = vector.broadcast %cst_75 : f32 to vector<2x8xf32>
    %164 = arith.addf %162, %163 : vector<2x8xf32>
    %165 = arith.mulf %164, %157 : vector<2x8xf32>
    %cst_76 = arith.constant -0.284496725 : f32
    %166 = vector.broadcast %cst_76 : f32 to vector<2x8xf32>
    %167 = arith.addf %165, %166 : vector<2x8xf32>
    %168 = arith.mulf %167, %157 : vector<2x8xf32>
    %cst_77 = arith.constant 0.254829586 : f32
    %169 = vector.broadcast %cst_77 : f32 to vector<2x8xf32>
    %170 = arith.addf %168, %169 : vector<2x8xf32>
    %171 = arith.mulf %170, %157 : vector<2x8xf32>
    %cst_78 = arith.constant 0.000000e+00 : f32
    %172 = vector.broadcast %cst_78 : f32 to vector<2x8xf32>
    %173 = arith.subf %172, %151 : vector<2x8xf32>
    %174 = arith.mulf %173, %151 : vector<2x8xf32>
    %175 = math.exp %174 : vector<2x8xf32>
    %176 = arith.mulf %171, %175 : vector<2x8xf32>
    %cst_79 = arith.constant 1.000000e+00 : f32
    %177 = vector.broadcast %cst_79 : f32 to vector<2x8xf32>
    %178 = arith.subf %177, %176 : vector<2x8xf32>
    %cst_80 = arith.constant 0.000000e+00 : f32
    %179 = vector.broadcast %cst_80 : f32 to vector<2x8xf32>
    %180 = arith.cmpf olt, %150, %179 : vector<2x8xf32>
    %cst_81 = arith.constant 0.000000e+00 : f32
    %181 = vector.broadcast %cst_81 : f32 to vector<2x8xf32>
    %182 = arith.subf %181, %178 : vector<2x8xf32>
    %183 = arith.select %180, %182, %178 : vector<2x8xi1>, vector<2x8xf32>
    %cst_82 = arith.constant 1.000000e+00 : f32
    %184 = vector.broadcast %cst_82 : f32 to vector<2x8xf32>
    %185 = arith.addf %184, %183 : vector<2x8xf32>
    %186 = arith.mulf %148, %185 : vector<2x8xf32>
    %c0_83 = arith.constant 0 : index
    %c0_84 = arith.constant 0 : index
    %187 = vector.load %arg9[%c0_83, %c0_84] : memref<8x128xf32, #tpu.memory_space<vmem>>, vector<8x128xf32>
    %cst_85 = arith.constant dense<0.000000e+00> : vector<2x128xf32>
    %188 = tpu.matmul %186, %187, %cst_85 {dimension_numbers = #tpu.dot_dimension_numbers<[1], [0], [0], [1], [0, 0, 1, 1], [], []>} : vector<2x8xf32>, vector<8x128xf32>, vector<2x128xf32> -> vector<2x128xf32>
    %189 = arith.addf %104, %188 : vector<2x128xf32>
    %190 = arith.addf %189, %6 : vector<2x128xf32>
    %c0_86 = arith.constant 0 : index
    %c0_87 = arith.constant 0 : index
    %191 = vector.load %arg10[%c0_86, %c0_87] : memref<1x128xf32, #tpu.memory_space<vmem>>, vector<1x128xf32>
    %c0_88 = arith.constant 0 : index
    %c0_89 = arith.constant 0 : index
    %192 = vector.load %arg11[%c0_88, %c0_89] : memref<1x128xf32, #tpu.memory_space<vmem>>, vector<1x128xf32>
    %cst_90 = arith.constant dense<0.000000e+00> : vector<2x128xf32>
    %193 = tpu.matmul %190, %0, %cst_90 {dimension_numbers = #tpu.dot_dimension_numbers<[1], [0], [0], [1], [0, 0, 1, 1], [], []>} : vector<2x128xf32>, vector<128x128xf32>, vector<2x128xf32> -> vector<2x128xf32>
    %194 = arith.subf %190, %193 : vector<2x128xf32>
    %195 = arith.mulf %194, %194 : vector<2x128xf32>
    %cst_91 = arith.constant dense<0.000000e+00> : vector<2x128xf32>
    %196 = tpu.matmul %195, %0, %cst_91 {dimension_numbers = #tpu.dot_dimension_numbers<[1], [0], [0], [1], [0, 0, 1, 1], [], []>} : vector<2x128xf32>, vector<128x128xf32>, vector<2x128xf32> -> vector<2x128xf32>
    %cst_92 = arith.constant 9.99999974E-6 : f32
    %197 = vector.broadcast %cst_92 : f32 to vector<2x128xf32>
    %198 = arith.addf %196, %197 : vector<2x128xf32>
    %199 = math.rsqrt %198 : vector<2x128xf32>
    %200 = arith.mulf %194, %199 : vector<2x128xf32>
    %201 = vector.broadcast %191 : vector<1x128xf32> to vector<2x128xf32>
    %202 = arith.mulf %200, %201 : vector<2x128xf32>
    %203 = vector.broadcast %192 : vector<1x128xf32> to vector<2x128xf32>
    %204 = arith.addf %202, %203 : vector<2x128xf32>
    %c0_93 = arith.constant 0 : index
    %c0_94 = arith.constant 0 : index
    %205 = vector.load %arg12[%c0_93, %c0_94] : memref<128x32xf32, #tpu.memory_space<vmem>>, vector<128x32xf32>
    %cst_95 = arith.constant dense<0.000000e+00> : vector<2x32xf32>
    %206 = tpu.matmul %204, %205, %cst_95 {dimension_numbers = #tpu.dot_dimension_numbers<[1], [0], [0], [1], [0, 0, 1, 1], [], []>} : vector<2x128xf32>, vector<128x32xf32>, vector<2x32xf32> -> vector<2x32xf32>
    %cst_96 = arith.constant 5.000000e-01 : f32
    %207 = vector.broadcast %cst_96 : f32 to vector<2x32xf32>
    %208 = arith.mulf %207, %206 : vector<2x32xf32>
    %cst_97 = arith.constant 0.707106769 : f32
    %209 = vector.broadcast %cst_97 : f32 to vector<2x32xf32>
    %210 = arith.mulf %206, %209 : vector<2x32xf32>
    %211 = math.absf %210 : vector<2x32xf32>
    %cst_98 = arith.constant 0.327591091 : f32
    %212 = vector.broadcast %cst_98 : f32 to vector<2x32xf32>
    %213 = arith.mulf %212, %211 : vector<2x32xf32>
    %cst_99 = arith.constant 1.000000e+00 : f32
    %214 = vector.broadcast %cst_99 : f32 to vector<2x32xf32>
    %215 = arith.addf %214, %213 : vector<2x32xf32>
    %cst_100 = arith.constant 1.000000e+00 : f32
    %216 = vector.broadcast %cst_100 : f32 to vector<2x32xf32>
    %217 = arith.divf %216, %215 : vector<2x32xf32>
    %cst_101 = arith.constant 1.06140542 : f32
    %218 = vector.broadcast %cst_101 : f32 to vector<2x32xf32>
    %219 = arith.mulf %218, %217 : vector<2x32xf32>
    %cst_102 = arith.constant -1.45315206 : f32
    %220 = vector.broadcast %cst_102 : f32 to vector<2x32xf32>
    %221 = arith.addf %219, %220 : vector<2x32xf32>
    %222 = arith.mulf %221, %217 : vector<2x32xf32>
    %cst_103 = arith.constant 1.42141378 : f32
    %223 = vector.broadcast %cst_103 : f32 to vector<2x32xf32>
    %224 = arith.addf %222, %223 : vector<2x32xf32>
    %225 = arith.mulf %224, %217 : vector<2x32xf32>
    %cst_104 = arith.constant -0.284496725 : f32
    %226 = vector.broadcast %cst_104 : f32 to vector<2x32xf32>
    %227 = arith.addf %225, %226 : vector<2x32xf32>
    %228 = arith.mulf %227, %217 : vector<2x32xf32>
    %cst_105 = arith.constant 0.254829586 : f32
    %229 = vector.broadcast %cst_105 : f32 to vector<2x32xf32>
    %230 = arith.addf %228, %229 : vector<2x32xf32>
    %231 = arith.mulf %230, %217 : vector<2x32xf32>
    %cst_106 = arith.constant 0.000000e+00 : f32
    %232 = vector.broadcast %cst_106 : f32 to vector<2x32xf32>
    %233 = arith.subf %232, %211 : vector<2x32xf32>
    %234 = arith.mulf %233, %211 : vector<2x32xf32>
    %235 = math.exp %234 : vector<2x32xf32>
    %236 = arith.mulf %231, %235 : vector<2x32xf32>
    %cst_107 = arith.constant 1.000000e+00 : f32
    %237 = vector.broadcast %cst_107 : f32 to vector<2x32xf32>
    %238 = arith.subf %237, %236 : vector<2x32xf32>
    %cst_108 = arith.constant 0.000000e+00 : f32
    %239 = vector.broadcast %cst_108 : f32 to vector<2x32xf32>
    %240 = arith.cmpf olt, %210, %239 : vector<2x32xf32>
    %cst_109 = arith.constant 0.000000e+00 : f32
    %241 = vector.broadcast %cst_109 : f32 to vector<2x32xf32>
    %242 = arith.subf %241, %238 : vector<2x32xf32>
    %243 = arith.select %240, %242, %238 : vector<2x32xi1>, vector<2x32xf32>
    %cst_110 = arith.constant 1.000000e+00 : f32
    %244 = vector.broadcast %cst_110 : f32 to vector<2x32xf32>
    %245 = arith.addf %244, %243 : vector<2x32xf32>
    %246 = arith.mulf %208, %245 : vector<2x32xf32>
    %cst_111 = arith.constant 5.000000e-01 : f32
    %247 = vector.broadcast %cst_111 : f32 to vector<2x32xf32>
    %248 = arith.mulf %247, %246 : vector<2x32xf32>
    %cst_112 = arith.constant 0.707106769 : f32
    %249 = vector.broadcast %cst_112 : f32 to vector<2x32xf32>
    %250 = arith.mulf %246, %249 : vector<2x32xf32>
    %251 = math.absf %250 : vector<2x32xf32>
    %cst_113 = arith.constant 0.327591091 : f32
    %252 = vector.broadcast %cst_113 : f32 to vector<2x32xf32>
    %253 = arith.mulf %252, %251 : vector<2x32xf32>
    %cst_114 = arith.constant 1.000000e+00 : f32
    %254 = vector.broadcast %cst_114 : f32 to vector<2x32xf32>
    %255 = arith.addf %254, %253 : vector<2x32xf32>
    %cst_115 = arith.constant 1.000000e+00 : f32
    %256 = vector.broadcast %cst_115 : f32 to vector<2x32xf32>
    %257 = arith.divf %256, %255 : vector<2x32xf32>
    %cst_116 = arith.constant 1.06140542 : f32
    %258 = vector.broadcast %cst_116 : f32 to vector<2x32xf32>
    %259 = arith.mulf %258, %257 : vector<2x32xf32>
    %cst_117 = arith.constant -1.45315206 : f32
    %260 = vector.broadcast %cst_117 : f32 to vector<2x32xf32>
    %261 = arith.addf %259, %260 : vector<2x32xf32>
    %262 = arith.mulf %261, %257 : vector<2x32xf32>
    %cst_118 = arith.constant 1.42141378 : f32
    %263 = vector.broadcast %cst_118 : f32 to vector<2x32xf32>
    %264 = arith.addf %262, %263 : vector<2x32xf32>
    %265 = arith.mulf %264, %257 : vector<2x32xf32>
    %cst_119 = arith.constant -0.284496725 : f32
    %266 = vector.broadcast %cst_119 : f32 to vector<2x32xf32>
    %267 = arith.addf %265, %266 : vector<2x32xf32>
    %268 = arith.mulf %267, %257 : vector<2x32xf32>
    %cst_120 = arith.constant 0.254829586 : f32
    %269 = vector.broadcast %cst_120 : f32 to vector<2x32xf32>
    %270 = arith.addf %268, %269 : vector<2x32xf32>
    %271 = arith.mulf %270, %257 : vector<2x32xf32>
    %cst_121 = arith.constant 0.000000e+00 : f32
    %272 = vector.broadcast %cst_121 : f32 to vector<2x32xf32>
    %273 = arith.subf %272, %251 : vector<2x32xf32>
    %274 = arith.mulf %273, %251 : vector<2x32xf32>
    %275 = math.exp %274 : vector<2x32xf32>
    %276 = arith.mulf %271, %275 : vector<2x32xf32>
    %cst_122 = arith.constant 1.000000e+00 : f32
    %277 = vector.broadcast %cst_122 : f32 to vector<2x32xf32>
    %278 = arith.subf %277, %276 : vector<2x32xf32>
    %cst_123 = arith.constant 0.000000e+00 : f32
    %279 = vector.broadcast %cst_123 : f32 to vector<2x32xf32>
    %280 = arith.cmpf olt, %250, %279 : vector<2x32xf32>
    %cst_124 = arith.constant 0.000000e+00 : f32
    %281 = vector.broadcast %cst_124 : f32 to vector<2x32xf32>
    %282 = arith.subf %281, %278 : vector<2x32xf32>
    %283 = arith.select %280, %282, %278 : vector<2x32xi1>, vector<2x32xf32>
    %cst_125 = arith.constant 1.000000e+00 : f32
    %284 = vector.broadcast %cst_125 : f32 to vector<2x32xf32>
    %285 = arith.addf %284, %283 : vector<2x32xf32>
    %286 = arith.mulf %248, %285 : vector<2x32xf32>
    %c0_126 = arith.constant 0 : index
    %c0_127 = arith.constant 0 : index
    %287 = vector.load %arg13[%c0_126, %c0_127] : memref<32x128xf32, #tpu.memory_space<vmem>>, vector<32x128xf32>
    %cst_128 = arith.constant dense<0.000000e+00> : vector<2x128xf32>
    %288 = tpu.matmul %286, %287, %cst_128 {dimension_numbers = #tpu.dot_dimension_numbers<[1], [0], [0], [1], [0, 0, 1, 1], [], []>} : vector<2x32xf32>, vector<32x128xf32>, vector<2x128xf32> -> vector<2x128xf32>
    %c0_129 = arith.constant 0 : index
    %c0_130 = arith.constant 0 : index
    %289 = vector.load %arg14[%c0_129, %c0_130] : memref<32x8xf32, #tpu.memory_space<vmem>>, vector<32x8xf32>
    %cst_131 = arith.constant dense<0.000000e+00> : vector<2x8xf32>
    %290 = tpu.matmul %286, %289, %cst_131 {dimension_numbers = #tpu.dot_dimension_numbers<[1], [0], [0], [1], [0, 0, 1, 1], [], []>} : vector<2x32xf32>, vector<32x8xf32>, vector<2x8xf32> -> vector<2x8xf32>
    %cst_132 = arith.constant 5.000000e-01 : f32
    %291 = vector.broadcast %cst_132 : f32 to vector<2x8xf32>
    %292 = arith.mulf %291, %290 : vector<2x8xf32>
    %cst_133 = arith.constant 0.707106769 : f32
    %293 = vector.broadcast %cst_133 : f32 to vector<2x8xf32>
    %294 = arith.mulf %290, %293 : vector<2x8xf32>
    %295 = math.absf %294 : vector<2x8xf32>
    %cst_134 = arith.constant 0.327591091 : f32
    %296 = vector.broadcast %cst_134 : f32 to vector<2x8xf32>
    %297 = arith.mulf %296, %295 : vector<2x8xf32>
    %cst_135 = arith.constant 1.000000e+00 : f32
    %298 = vector.broadcast %cst_135 : f32 to vector<2x8xf32>
    %299 = arith.addf %298, %297 : vector<2x8xf32>
    %cst_136 = arith.constant 1.000000e+00 : f32
    %300 = vector.broadcast %cst_136 : f32 to vector<2x8xf32>
    %301 = arith.divf %300, %299 : vector<2x8xf32>
    %cst_137 = arith.constant 1.06140542 : f32
    %302 = vector.broadcast %cst_137 : f32 to vector<2x8xf32>
    %303 = arith.mulf %302, %301 : vector<2x8xf32>
    %cst_138 = arith.constant -1.45315206 : f32
    %304 = vector.broadcast %cst_138 : f32 to vector<2x8xf32>
    %305 = arith.addf %303, %304 : vector<2x8xf32>
    %306 = arith.mulf %305, %301 : vector<2x8xf32>
    %cst_139 = arith.constant 1.42141378 : f32
    %307 = vector.broadcast %cst_139 : f32 to vector<2x8xf32>
    %308 = arith.addf %306, %307 : vector<2x8xf32>
    %309 = arith.mulf %308, %301 : vector<2x8xf32>
    %cst_140 = arith.constant -0.284496725 : f32
    %310 = vector.broadcast %cst_140 : f32 to vector<2x8xf32>
    %311 = arith.addf %309, %310 : vector<2x8xf32>
    %312 = arith.mulf %311, %301 : vector<2x8xf32>
    %cst_141 = arith.constant 0.254829586 : f32
    %313 = vector.broadcast %cst_141 : f32 to vector<2x8xf32>
    %314 = arith.addf %312, %313 : vector<2x8xf32>
    %315 = arith.mulf %314, %301 : vector<2x8xf32>
    %cst_142 = arith.constant 0.000000e+00 : f32
    %316 = vector.broadcast %cst_142 : f32 to vector<2x8xf32>
    %317 = arith.subf %316, %295 : vector<2x8xf32>
    %318 = arith.mulf %317, %295 : vector<2x8xf32>
    %319 = math.exp %318 : vector<2x8xf32>
    %320 = arith.mulf %315, %319 : vector<2x8xf32>
    %cst_143 = arith.constant 1.000000e+00 : f32
    %321 = vector.broadcast %cst_143 : f32 to vector<2x8xf32>
    %322 = arith.subf %321, %320 : vector<2x8xf32>
    %cst_144 = arith.constant 0.000000e+00 : f32
    %323 = vector.broadcast %cst_144 : f32 to vector<2x8xf32>
    %324 = arith.cmpf olt, %294, %323 : vector<2x8xf32>
    %cst_145 = arith.constant 0.000000e+00 : f32
    %325 = vector.broadcast %cst_145 : f32 to vector<2x8xf32>
    %326 = arith.subf %325, %322 : vector<2x8xf32>
    %327 = arith.select %324, %326, %322 : vector<2x8xi1>, vector<2x8xf32>
    %cst_146 = arith.constant 1.000000e+00 : f32
    %328 = vector.broadcast %cst_146 : f32 to vector<2x8xf32>
    %329 = arith.addf %328, %327 : vector<2x8xf32>
    %330 = arith.mulf %292, %329 : vector<2x8xf32>
    %cst_147 = arith.constant 5.000000e-01 : f32
    %331 = vector.broadcast %cst_147 : f32 to vector<2x8xf32>
    %332 = arith.mulf %331, %330 : vector<2x8xf32>
    %cst_148 = arith.constant 0.707106769 : f32
    %333 = vector.broadcast %cst_148 : f32 to vector<2x8xf32>
    %334 = arith.mulf %330, %333 : vector<2x8xf32>
    %335 = math.absf %334 : vector<2x8xf32>
    %cst_149 = arith.constant 0.327591091 : f32
    %336 = vector.broadcast %cst_149 : f32 to vector<2x8xf32>
    %337 = arith.mulf %336, %335 : vector<2x8xf32>
    %cst_150 = arith.constant 1.000000e+00 : f32
    %338 = vector.broadcast %cst_150 : f32 to vector<2x8xf32>
    %339 = arith.addf %338, %337 : vector<2x8xf32>
    %cst_151 = arith.constant 1.000000e+00 : f32
    %340 = vector.broadcast %cst_151 : f32 to vector<2x8xf32>
    %341 = arith.divf %340, %339 : vector<2x8xf32>
    %cst_152 = arith.constant 1.06140542 : f32
    %342 = vector.broadcast %cst_152 : f32 to vector<2x8xf32>
    %343 = arith.mulf %342, %341 : vector<2x8xf32>
    %cst_153 = arith.constant -1.45315206 : f32
    %344 = vector.broadcast %cst_153 : f32 to vector<2x8xf32>
    %345 = arith.addf %343, %344 : vector<2x8xf32>
    %346 = arith.mulf %345, %341 : vector<2x8xf32>
    %cst_154 = arith.constant 1.42141378 : f32
    %347 = vector.broadcast %cst_154 : f32 to vector<2x8xf32>
    %348 = arith.addf %346, %347 : vector<2x8xf32>
    %349 = arith.mulf %348, %341 : vector<2x8xf32>
    %cst_155 = arith.constant -0.284496725 : f32
    %350 = vector.broadcast %cst_155 : f32 to vector<2x8xf32>
    %351 = arith.addf %349, %350 : vector<2x8xf32>
    %352 = arith.mulf %351, %341 : vector<2x8xf32>
    %cst_156 = arith.constant 0.254829586 : f32
    %353 = vector.broadcast %cst_156 : f32 to vector<2x8xf32>
    %354 = arith.addf %352, %353 : vector<2x8xf32>
    %355 = arith.mulf %354, %341 : vector<2x8xf32>
    %cst_157 = arith.constant 0.000000e+00 : f32
    %356 = vector.broadcast %cst_157 : f32 to vector<2x8xf32>
    %357 = arith.subf %356, %335 : vector<2x8xf32>
    %358 = arith.mulf %357, %335 : vector<2x8xf32>
    %359 = math.exp %358 : vector<2x8xf32>
    %360 = arith.mulf %355, %359 : vector<2x8xf32>
    %cst_158 = arith.constant 1.000000e+00 : f32
    %361 = vector.broadcast %cst_158 : f32 to vector<2x8xf32>
    %362 = arith.subf %361, %360 : vector<2x8xf32>
    %cst_159 = arith.constant 0.000000e+00 : f32
    %363 = vector.broadcast %cst_159 : f32 to vector<2x8xf32>
    %364 = arith.cmpf olt, %334, %363 : vector<2x8xf32>
    %cst_160 = arith.constant 0.000000e+00 : f32
    %365 = vector.broadcast %cst_160 : f32 to vector<2x8xf32>
    %366 = arith.subf %365, %362 : vector<2x8xf32>
    %367 = arith.select %364, %366, %362 : vector<2x8xi1>, vector<2x8xf32>
    %cst_161 = arith.constant 1.000000e+00 : f32
    %368 = vector.broadcast %cst_161 : f32 to vector<2x8xf32>
    %369 = arith.addf %368, %367 : vector<2x8xf32>
    %370 = arith.mulf %332, %369 : vector<2x8xf32>
    %c0_162 = arith.constant 0 : index
    %c0_163 = arith.constant 0 : index
    %371 = vector.load %arg15[%c0_162, %c0_163] : memref<8x128xf32, #tpu.memory_space<vmem>>, vector<8x128xf32>
    %cst_164 = arith.constant dense<0.000000e+00> : vector<2x128xf32>
    %372 = tpu.matmul %370, %371, %cst_164 {dimension_numbers = #tpu.dot_dimension_numbers<[1], [0], [0], [1], [0, 0, 1, 1], [], []>} : vector<2x8xf32>, vector<8x128xf32>, vector<2x128xf32> -> vector<2x128xf32>
    %373 = arith.addf %288, %372 : vector<2x128xf32>
    %374 = arith.addf %373, %190 : vector<2x128xf32>
    %c0_165 = arith.constant 0 : index
    %c0_166 = arith.constant 0 : index
    %375 = vector.load %arg16[%c0_165, %c0_166] : memref<1x128xf32, #tpu.memory_space<vmem>>, vector<1x128xf32>
    %c0_167 = arith.constant 0 : index
    %c0_168 = arith.constant 0 : index
    %376 = vector.load %arg17[%c0_167, %c0_168] : memref<1x128xf32, #tpu.memory_space<vmem>>, vector<1x128xf32>
    %cst_169 = arith.constant dense<0.000000e+00> : vector<2x128xf32>
    %377 = tpu.matmul %374, %0, %cst_169 {dimension_numbers = #tpu.dot_dimension_numbers<[1], [0], [0], [1], [0, 0, 1, 1], [], []>} : vector<2x128xf32>, vector<128x128xf32>, vector<2x128xf32> -> vector<2x128xf32>
    %378 = arith.subf %374, %377 : vector<2x128xf32>
    %379 = arith.mulf %378, %378 : vector<2x128xf32>
    %cst_170 = arith.constant dense<0.000000e+00> : vector<2x128xf32>
    %380 = tpu.matmul %379, %0, %cst_170 {dimension_numbers = #tpu.dot_dimension_numbers<[1], [0], [0], [1], [0, 0, 1, 1], [], []>} : vector<2x128xf32>, vector<128x128xf32>, vector<2x128xf32> -> vector<2x128xf32>
    %cst_171 = arith.constant 9.99999974E-6 : f32
    %381 = vector.broadcast %cst_171 : f32 to vector<2x128xf32>
    %382 = arith.addf %380, %381 : vector<2x128xf32>
    %383 = math.rsqrt %382 : vector<2x128xf32>
    %384 = arith.mulf %378, %383 : vector<2x128xf32>
    %385 = vector.broadcast %375 : vector<1x128xf32> to vector<2x128xf32>
    %386 = arith.mulf %384, %385 : vector<2x128xf32>
    %387 = vector.broadcast %376 : vector<1x128xf32> to vector<2x128xf32>
    %388 = arith.addf %386, %387 : vector<2x128xf32>
    %c0_172 = arith.constant 0 : index
    %c0_173 = arith.constant 0 : index
    %389 = vector.load %arg18[%c0_172, %c0_173] : memref<128x256xf32, #tpu.memory_space<vmem>>, vector<128x256xf32>
    %cst_174 = arith.constant dense<0.000000e+00> : vector<2x256xf32>
    %390 = tpu.matmul %388, %389, %cst_174 {dimension_numbers = #tpu.dot_dimension_numbers<[1], [0], [0], [1], [0, 0, 1, 1], [], []>} : vector<2x128xf32>, vector<128x256xf32>, vector<2x256xf32> -> vector<2x256xf32>
    %c0_175 = arith.constant 0 : index
    %c0_176 = arith.constant 0 : index
    %391 = vector.load %arg19[%c0_175, %c0_176] : memref<1x256xf32, #tpu.memory_space<vmem>>, vector<1x256xf32>
    %392 = vector.broadcast %391 : vector<1x256xf32> to vector<2x256xf32>
    %393 = arith.addf %390, %392 : vector<2x256xf32>
    %cst_177 = arith.constant 0.000000e+00 : f32
    %394 = vector.broadcast %cst_177 : f32 to vector<2x256xf32>
    %395 = arith.cmpf oge, %393, %394 : vector<2x256xf32>
    %cst_178 = arith.constant 0.00999999977 : f32
    %396 = vector.broadcast %cst_178 : f32 to vector<2x256xf32>
    %397 = arith.mulf %396, %393 : vector<2x256xf32>
    %398 = arith.select %395, %393, %397 : vector<2x256xi1>, vector<2x256xf32>
    %c0_179 = arith.constant 0 : index
    %c0_180 = arith.constant 0 : index
    %399 = vector.load %arg20[%c0_179, %c0_180] : memref<256x32xf32, #tpu.memory_space<vmem>>, vector<256x32xf32>
    %cst_181 = arith.constant dense<0.000000e+00> : vector<2x32xf32>
    %400 = tpu.matmul %398, %399, %cst_181 {dimension_numbers = #tpu.dot_dimension_numbers<[1], [0], [0], [1], [0, 0, 1, 1], [], []>} : vector<2x256xf32>, vector<256x32xf32>, vector<2x32xf32> -> vector<2x32xf32>
    %c0_182 = arith.constant 0 : index
    %c0_183 = arith.constant 0 : index
    %401 = vector.load %arg21[%c0_182, %c0_183] : memref<1x32xf32, #tpu.memory_space<vmem>>, vector<1x32xf32>
    %402 = vector.broadcast %401 : vector<1x32xf32> to vector<2x32xf32>
    %403 = arith.addf %400, %402 : vector<2x32xf32>
    %c0_184 = arith.constant 0 : index
    %c0_185 = arith.constant 0 : index
    %404 = vector.load %arg22[%c0_184, %c0_185] : memref<2x32xf32, #tpu.memory_space<vmem>>, vector<2x32xf32>
    tpu.vector_store %arg22[%c0_184, %c0_185], %403 {strides = array<i32>} : memref<2x32xf32, #tpu.memory_space<vmem>>, vector<2x32xf32>,
    return
  }
}

</mosaic_0001>

<llo_original>
// kernel: _lambda_.1
$region0: #{_lambda_.1}
  #allocation0 [shape = 'u32[]', space=smem, size = 0x4, offset = 0x4, fixed_abs, tag = 'smem constant byte address 0x4 - core index']
  #allocation1 [shape = 'u32[144,128]{1,0:T(1,128)}', space=vmem, size = 0x12000, scoped, tag = 'internal scratch']
  %s0 = inlined_call_operand.vmem [shape: f32[2,64], index: 0, kind: input, shape index: {}]
  %s1 = inlined_call_operand.hbm [shape: f32[128,128], index: 1, kind: input, shape index: {}]
  %s2 = inlined_call_operand.hbm [shape: f32[64,128], index: 2, kind: input, shape index: {}]
  %s3 = inlined_call_operand.vmem [shape: f32[1,128], index: 3, kind: input, shape index: {}]
  %s4 = inlined_call_operand.vmem [shape: f32[1,128], index: 4, kind: input, shape index: {}, may-alias: {4,10,16}]
  %s5 = inlined_call_operand.vmem [shape: f32[1,128], index: 5, kind: input, shape index: {}, may-alias: {5,11,17}]
  %s6 = inlined_call_operand.hbm [shape: f32[128,32], index: 6, kind: input, shape index: {}]
  %s7 = inlined_call_operand.vmem [shape: f32[32,128], index: 7, kind: input, shape index: {}]
  %s8 = inlined_call_operand.vmem [shape: f32[32,8], index: 8, kind: input, shape index: {}]
  %s9 = inlined_call_operand.vmem [shape: f32[8,128], index: 9, kind: input, shape index: {}]
  %s10 = inlined_call_operand.vmem [shape: f32[1,128], index: 10, kind: input, shape index: {}, may-alias: {4,10,16}]
  %s11 = inlined_call_operand.vmem [shape: f32[1,128], index: 11, kind: input, shape index: {}, may-alias: {5,11,17}]
  %s12 = inlined_call_operand.hbm [shape: f32[128,32], index: 12, kind: input, shape index: {}]
  %s13 = inlined_call_operand.hbm [shape: f32[32,128], index: 13, kind: input, shape index: {}]
  %s14 = inlined_call_operand.hbm [shape: f32[32,8], index: 14, kind: input, shape index: {}]
  %s15 = inlined_call_operand.vmem [shape: f32[8,128], index: 15, kind: input, shape index: {}]
  %s16 = inlined_call_operand.vmem [shape: f32[1,128], index: 16, kind: input, shape index: {}, may-alias: {4,10,16}]
  %s17 = inlined_call_operand.vmem [shape: f32[1,128], index: 17, kind: input, shape index: {}, may-alias: {5,11,17}]
  %s18 = inlined_call_operand.hbm [shape: f32[128,256], index: 18, kind: input, shape index: {}]
  %s19 = inlined_call_operand.vmem [shape: f32[1,256], index: 19, kind: input, shape index: {}]
  %s20 = inlined_call_operand.hbm [shape: f32[256,32], index: 20, kind: input, shape index: {}]
  %s21 = inlined_call_operand.vmem [shape: f32[1,32], index: 21, kind: input, shape index: {}]
  %s22 = inlined_call_operand.vmem [shape: f32[2,32], index: 22, kind: output, shape index: {}]
  %s23 = sld [smem:[#allocation0]]
  $region130: #{_lambda_.1} parent=0
    _
  %s25 = ssub.s32 1, %s23
  %s26 = scalar_select 0, %s25, %s23
  $region1: #{_lambda_.1} parent=0
    #allocation2 [shape = 'u8[65536]{0}', space=vmem, size = 0x10000, scoped, tag = 'input window, operand 1, single buffered']
    #allocation3 [shape = 's32[1]{0}', space=sflag, size = 0x4, scoped, tag = 'scoped memory for _lambda_.1']
    #allocation4 [shape = 'u8[32768]{0}', space=vmem, size = 0x8000, scoped, tag = 'input window, operand 2, single buffered']
    #allocation5 [shape = 's32[1]{0}', space=sflag, size = 0x4, scoped, tag = 'scoped memory for _lambda_.1']
    #allocation6 [shape = 'u8[65536]{0}', space=vmem, size = 0x10000, scoped, tag = 'input window, operand 6, single buffered']
    #allocation7 [shape = 'u8[65536]{0}', space=vmem, size = 0x10000, scoped, tag = 'input window, operand 12, single buffered']
    #allocation8 [shape = 's32[1]{0}', space=sflag, size = 0x4, scoped, tag = 'scoped memory for _lambda_.1']
    #allocation9 [shape = 'u8[16384]{0}', space=vmem, size = 0x4000, scoped, tag = 'input window, operand 13, single buffered']
    #allocation10 [shape = 'u8[16384]{0}', space=vmem, size = 0x4000, scoped, tag = 'input window, operand 14, single buffered']
    #allocation11 [shape = 's32[1]{0}', space=sflag, size = 0x4, scoped, tag = 'scoped memory for _lambda_.1']
    #allocation12 [shape = 'u8[131072]{0}', space=vmem, size = 0x20000, scoped, tag = 'input window, operand 18, single buffered']
    #allocation13 [shape = 'u8[131072]{0}', space=vmem, size = 0x20000, scoped, tag = 'input window, operand 20, single buffered']
    #allocation14 [shape = 's32[1]{0}', space=sflag, size = 0x4, scoped, tag = 'scoped memory for _lambda_.1']
    %27 = vsyncpa [#allocation3], 0
    %28 = vsyncpa [#allocation5], 0
    %29 = vsyncpa [#allocation8], 0
    %30 = vsyncpa [#allocation11], 0
    %31 = vsyncpa [#allocation14], 0
    // Predicated region
    $region2: #{_lambda_.1} parent=1 // pred_check
      _
    $region3: #{_lambda_.1} parent=1 // pred_check_branch
      %33 = sbr.rel (0) target = $region5
    $region4: #{_lambda_.1} parent=1 // pred_region
      _
    $region5: #{_lambda_.1} parent=1 // pred_fallthru
      _
    // Predicated region
    $region6: #{_lambda_.1} parent=1 // pred_check
      _
    $region7: #{_lambda_.1} parent=1 // pred_check_branch
      %35 = sbr.rel (0) target = $region9
    $region8: #{_lambda_.1} parent=1 // pred_region
      %s37 = ssub.s32 2048, 2048
      %38 = vsyncadd [#allocation3], %s37
      %s39 = sshll.u32 [#allocation2], 4
      %s40 = int_to_ptr.vmem [resolvable:$true] %s39
      %45 = dma.hbm_to_vmem [thread:$0]  %s1, 2048, %s40, [#allocation3], 128, 128, 8
    $region9: #{_lambda_.1} parent=1 // pred_fallthru
      _
    // Predicated region
    $region10: #{_lambda_.1} parent=1 // pred_check
      _
    $region11: #{_lambda_.1} parent=1 // pred_check_branch
      %47 = sbr.rel (0) target = $region13
    $region12: #{_lambda_.1} parent=1 // pred_region
      %s49 = ssub.s32 1024, 1024
      %50 = vsyncadd [#allocation5], %s49
      %s51 = sshll.u32 [#allocation4], 4
      %s52 = int_to_ptr.vmem [resolvable:$true] %s51
      %57 = dma.hbm_to_vmem [thread:$0]  %s2, 1024, %s52, [#allocation5], 128, 128, 8
    $region13: #{_lambda_.1} parent=1 // pred_fallthru
      _
    // Predicated region
    $region14: #{_lambda_.1} parent=1 // pred_check
      _
    $region15: #{_lambda_.1} parent=1 // pred_check_branch
      %59 = sbr.rel (0) target = $region17
    $region16: #{_lambda_.1} parent=1 // pred_region
      _
    $region17: #{_lambda_.1} parent=1 // pred_fallthru
      _
    // Predicated region
    $region18: #{_lambda_.1} parent=1 // pred_check
      _
    $region19: #{_lambda_.1} parent=1 // pred_check_branch
      %61 = sbr.rel (0) target = $region21
    $region20: #{_lambda_.1} parent=1 // pred_region
      _
    $region21: #{_lambda_.1} parent=1 // pred_fallthru
      _
    // Predicated region
    $region22: #{_lambda_.1} parent=1 // pred_check
      _
    $region23: #{_lambda_.1} parent=1 // pred_check_branch
      %63 = sbr.rel (0) target = $region25
    $region24: #{_lambda_.1} parent=1 // pred_region
      _
    $region25: #{_lambda_.1} parent=1 // pred_fallthru
      _
    // Predicated region
    $region26: #{_lambda_.1} parent=1 // pred_check
      _
    $region27: #{_lambda_.1} parent=1 // pred_check_branch
      %65 = sbr.rel (0) target = $region29
    $region28: #{_lambda_.1} parent=1 // pred_region
      %s67 = ssub.s32 2048, 2048
      %68 = vsyncadd [#allocation5], %s67
      %s69 = sshll.u32 [#allocation6], 4
      %s70 = int_to_ptr.vmem [resolvable:$true] %s69
      %75 = dma.hbm_to_vmem [thread:$0]  %s6, 2048, %s70, [#allocation5], 128, 128, 8
    $region29: #{_lambda_.1} parent=1 // pred_fallthru
      _
    // Predicated region
    $region30: #{_lambda_.1} parent=1 // pred_check
      _
    $region31: #{_lambda_.1} parent=1 // pred_check_branch
      %77 = sbr.rel (0) target = $region33
    $region32: #{_lambda_.1} parent=1 // pred_region
      _
    $region33: #{_lambda_.1} parent=1 // pred_fallthru
      _
    // Predicated region
    $region34: #{_lambda_.1} parent=1 // pred_check
      _
    $region35: #{_lambda_.1} parent=1 // pred_check_branch
      %79 = sbr.rel (0) target = $region37
    $region36: #{_lambda_.1} parent=1 // pred_region
      _
    $region37: #{_lambda_.1} parent=1 // pred_fallthru
      _
    // Predicated region
    $region38: #{_lambda_.1} parent=1 // pred_check
      _
    $region39: #{_lambda_.1} parent=1 // pred_check_branch
      %81 = sbr.rel (0) target = $region41
    $region40: #{_lambda_.1} parent=1 // pred_region
      _
    $region41: #{_lambda_.1} parent=1 // pred_fallthru
      _
    // Predicated region
    $region42: #{_lambda_.1} parent=1 // pred_check
      _
    $region43: #{_lambda_.1} parent=1 // pred_check_branch
      %83 = sbr.rel (0) target = $region45
    $region44: #{_lambda_.1} parent=1 // pred_region
      _
    $region45: #{_lambda_.1} parent=1 // pred_fallthru
      _
    // Predicated region
    $region46: #{_lambda_.1} parent=1 // pred_check
      _
    $region47: #{_lambda_.1} parent=1 // pred_check_branch
      %85 = sbr.rel (0) target = $region49
    $region48: #{_lambda_.1} parent=1 // pred_region
      _
    $region49: #{_lambda_.1} parent=1 // pred_fallthru
      _
    // Predicated region
    $region50: #{_lambda_.1} parent=1 // pred_check
      _
    $region51: #{_lambda_.1} parent=1 // pred_check_branch
      %87 = sbr.rel (0) target = $region53
    $region52: #{_lambda_.1} parent=1 // pred_region
      %s89 = ssub.s32 2048, 2048
      %90 = vsyncadd [#allocation8], %s89
      %s91 = sshll.u32 [#allocation7], 4
      %s92 = int_to_ptr.vmem [resolvable:$true] %s91
      %97 = dma.hbm_to_vmem [thread:$0]  %s12, 2048, %s92, [#allocation8], 128, 128, 8
    $region53: #{_lambda_.1} parent=1 // pred_fallthru
      _
    // Predicated region
    $region54: #{_lambda_.1} parent=1 // pred_check
      _
    $region55: #{_lambda_.1} parent=1 // pred_check_branch
      %99 = sbr.rel (0) target = $region57
    $region56: #{_lambda_.1} parent=1 // pred_region
      %s101 = ssub.s32 512, 512
      %102 = vsyncadd [#allocation8], %s101
      %s103 = sshll.u32 [#allocation9], 4
      %s104 = int_to_ptr.vmem [resolvable:$true] %s103
      %109 = dma.hbm_to_vmem [thread:$0]  %s13, 512, %s104, [#allocation8], 128, 128, 8
    $region57: #{_lambda_.1} parent=1 // pred_fallthru
      _
    // Predicated region
    $region58: #{_lambda_.1} parent=1 // pred_check
      _
    $region59: #{_lambda_.1} parent=1 // pred_check_branch
      %111 = sbr.rel (0) target = $region61
    $region60: #{_lambda_.1} parent=1 // pred_region
      %s113 = ssub.s32 512, 512
      %114 = vsyncadd [#allocation11], %s113
      %s115 = sshll.u32 [#allocation10], 4
      %s116 = int_to_ptr.vmem [resolvable:$true] %s115
      %121 = dma.hbm_to_vmem [thread:$0]  %s14, 512, %s116, [#allocation11], 128, 128, 8
    $region61: #{_lambda_.1} parent=1 // pred_fallthru
      _
    // Predicated region
    $region62: #{_lambda_.1} parent=1 // pred_check
      _
    $region63: #{_lambda_.1} parent=1 // pred_check_branch
      %123 = sbr.rel (0) target = $region65
    $region64: #{_lambda_.1} parent=1 // pred_region
      _
    $region65: #{_lambda_.1} parent=1 // pred_fallthru
      _
    // Predicated region
    $region66: #{_lambda_.1} parent=1 // pred_check
      _
    $region67: #{_lambda_.1} parent=1 // pred_check_branch
      %125 = sbr.rel (0) target = $region69
    $region68: #{_lambda_.1} parent=1 // pred_region
      _
    $region69: #{_lambda_.1} parent=1 // pred_fallthru
      _
    // Predicated region
    $region70: #{_lambda_.1} parent=1 // pred_check
      _
    $region71: #{_lambda_.1} parent=1 // pred_check_branch
      %127 = sbr.rel (0) target = $region73
    $region72: #{_lambda_.1} parent=1 // pred_region
      _
    $region73: #{_lambda_.1} parent=1 // pred_fallthru
      _
    // Predicated region
    $region74: #{_lambda_.1} parent=1 // pred_check
      _
    $region75: #{_lambda_.1} parent=1 // pred_check_branch
      %129 = sbr.rel (0) target = $region77
    $region76: #{_lambda_.1} parent=1 // pred_region
      %s131 = ssub.s32 4096, 4096
      %132 = vsyncadd [#allocation11], %s131
      %s133 = sshll.u32 [#allocation12], 4
      %s134 = int_to_ptr.vmem [resolvable:$true] %s133
      %139 = dma.hbm_to_vmem [thread:$0]  %s18, 4096, %s134, [#allocation11], 256, 256, 16
    $region77: #{_lambda_.1} parent=1 // pred_fallthru
      _
    // Predicated region
    $region78: #{_lambda_.1} parent=1 // pred_check
      _
    $region79: #{_lambda_.1} parent=1 // pred_check_branch
      %141 = sbr.rel (0) target = $region81
    $region80: #{_lambda_.1} parent=1 // pred_region
      _
    $region81: #{_lambda_.1} parent=1 // pred_fallthru
      _
    // Predicated region
    $region82: #{_lambda_.1} parent=1 // pred_check
      _
    $region83: #{_lambda_.1} parent=1 // pred_check_branch
      %143 = sbr.rel (0) target = $region85
    $region84: #{_lambda_.1} parent=1 // pred_region
      %s145 = ssub.s32 4096, 4096
      %146 = vsyncadd [#allocation14], %s145
      %s147 = sshll.u32 [#allocation13], 4
      %s148 = int_to_ptr.vmem [resolvable:$true] %s147
      %153 = dma.hbm_to_vmem [thread:$0]  %s20, 4096, %s148, [#allocation14], 128, 128, 8
    $region85: #{_lambda_.1} parent=1 // pred_fallthru
      _
    // Predicated region
    $region86: #{_lambda_.1} parent=1 // pred_check
      _
    $region87: #{_lambda_.1} parent=1 // pred_check_branch
      %155 = sbr.rel (0) target = $region89
    $region88: #{_lambda_.1} parent=1 // pred_region
      _
    $region89: #{_lambda_.1} parent=1 // pred_fallthru
      _
    // Predicated region
    $region90: #{_lambda_.1} parent=1 // pred_check
      _
    $region91: #{_lambda_.1} parent=1 // pred_check_branch
      %157 = sbr.rel (0) target = $region93
    $region92: #{_lambda_.1} parent=1 // pred_region
      %158 = dma.done [#allocation3], 2048
    $region93: #{_lambda_.1} parent=1 // pred_fallthru
      _
    // Predicated region
    $region94: #{_lambda_.1} parent=1 // pred_check
      _
    $region95: #{_lambda_.1} parent=1 // pred_check_branch
      %160 = sbr.rel (0) target = $region97
    $region96: #{_lambda_.1} parent=1 // pred_region
      %161 = dma.done [#allocation5], 1024
    $region97: #{_lambda_.1} parent=1 // pred_fallthru
      _
    // Predicated region
    $region98: #{_lambda_.1} parent=1 // pred_check
      _
    $region99: #{_lambda_.1} parent=1 // pred_check_branch
      %163 = sbr.rel (0) target = $region101
    $region100: #{_lambda_.1} parent=1 // pred_region
      %164 = dma.done [#allocation5], 2048
    $region101: #{_lambda_.1} parent=1 // pred_fallthru
      _
    // Predicated region
    $region102: #{_lambda_.1} parent=1 // pred_check
      _
    $region103: #{_lambda_.1} parent=1 // pred_check_branch
      %166 = sbr.rel (0) target = $region105
    $region104: #{_lambda_.1} parent=1 // pred_region
      %167 = dma.done [#allocation8], 2048
    $region105: #{_lambda_.1} parent=1 // pred_fallthru
      _
    // Predicated region
    $region106: #{_lambda_.1} parent=1 // pred_check
      _
    $region107: #{_lambda_.1} parent=1 // pred_check_branch
      %169 = sbr.rel (0) target = $region109
    $region108: #{_lambda_.1} parent=1 // pred_region
      %170 = dma.done [#allocation8], 512
    $region109: #{_lambda_.1} parent=1 // pred_fallthru
      _
    // Predicated region
    $region110: #{_lambda_.1} parent=1 // pred_check
      _
    $region111: #{_lambda_.1} parent=1 // pred_check_branch
      %172 = sbr.rel (0) target = $region113
    $region112: #{_lambda_.1} parent=1 // pred_region
      %173 = dma.done [#allocation11], 512
    $region113: #{_lambda_.1} parent=1 // pred_fallthru
      _
    // Predicated region
    $region114: #{_lambda_.1} parent=1 // pred_check
      _
    $region115: #{_lambda_.1} parent=1 // pred_check_branch
      %175 = sbr.rel (0) target = $region117
    $region116: #{_lambda_.1} parent=1 // pred_region
      %176 = dma.done [#allocation11], 4096
    $region117: #{_lambda_.1} parent=1 // pred_fallthru
      _
    // Predicated region
    $region118: #{_lambda_.1} parent=1 // pred_check
      _
    $region119: #{_lambda_.1} parent=1 // pred_check_branch
      %178 = sbr.rel (0) target = $region121
    $region120: #{_lambda_.1} parent=1 // pred_region
      %179 = dma.done [#allocation14], 4096
    $region121: #{_lambda_.1} parent=1 // pred_fallthru
      _
    %v180 = vld [vmem:[#allocation2] sm:$0xff]
    %v181 = vld [vmem:[#allocation2 + $0x8] sm:$0xff]
    %v182 = vld [vmem:[#allocation2 + $0x10] sm:$0xff]
    %v183 = vld [vmem:[#allocation2 + $0x18] sm:$0xff]
    %v184 = vld [vmem:[#allocation2 + $0x20] sm:$0xff]
    %v185 = vld [vmem:[#allocation2 + $0x28] sm:$0xff]
    %v186 = vld [vmem:[#allocation2 + $0x30] sm:$0xff]
    %v187 = vld [vmem:[#allocation2 + $0x38] sm:$0xff]
    %v188 = vld [vmem:[#allocation2 + $0x40] sm:$0xff]
    %v189 = vld [vmem:[#allocation2 + $0x48] sm:$0xff]
    %v190 = vld [vmem:[#allocation2 + $0x50] sm:$0xff]
    %v191 = vld [vmem:[#allocation2 + $0x58] sm:$0xff]
    %v192 = vld [vmem:[#allocation2 + $0x60] sm:$0xff]
    %v193 = vld [vmem:[#allocation2 + $0x68] sm:$0xff]
    %v194 = vld [vmem:[#allocation2 + $0x70] sm:$0xff]
    %v195 = vld [vmem:[#allocation2 + $0x78] sm:$0xff]
    %v196 = vld [vmem:[%s0] sm:$0x3]
    %v197 = vld [vmem:[#allocation4] sm:$0xff]
    %v198 = vld [vmem:[#allocation4 + $0x8] sm:$0xff]
    %v199 = vld [vmem:[#allocation4 + $0x10] sm:$0xff]
    %v200 = vld [vmem:[#allocation4 + $0x18] sm:$0xff]
    %v201 = vld [vmem:[#allocation4 + $0x20] sm:$0xff]
    %v202 = vld [vmem:[#allocation4 + $0x28] sm:$0xff]
    %v203 = vld [vmem:[#allocation4 + $0x30] sm:$0xff]
    %v204 = vld [vmem:[#allocation4 + $0x38] sm:$0xff]
    %v205 = vld [vmem:[%s3] sm:$0x1]
    %v207 = vlaneseq
    %v208 = vshrl.u32 %v207, 7
    %v209 = vsub.s32 0, %v208
    %v210 = vrot.slane %v205, %v209
    %vm212 = vcmask 523264
    %v214 = vsel %vm212, %v196, 0
    %216 = vmatprep.subr.mxu0 0.0
    %217 = vmatpush1.msra.mxu0 %v197
    %218 = vmatprep.subr.mxu0 0.0
    %219 = vmatpush1.msra.mxu0 %v198
    %220 = vmatprep.subr.mxu0 0.0
    %221 = vmatpush1.msra.mxu0 %v199
    %222 = vmatprep.subr.mxu0 0.0
    %223 = vmatpush1.msra.mxu0 %v200
    %224 = vmatprep.subr.mxu0 0.0
    %225 = vmatpush1.msra.mxu0 %v201
    %226 = vmatprep.subr.mxu0 0.0
    %227 = vmatpush1.msra.mxu0 %v202
    %228 = vmatprep.subr.mxu0 0.0
    %229 = vmatpush1.msra.mxu0 %v203
    %230 = vmatprep.subr.mxu0 0.0
    %231 = vmatpush1.msra.mxu0 %v204
    %232 = vmatprep.subr.mxu0 0.0
    %233 = vmatpush1.msra.mxu0 0.0
    %234 = vmatprep.subr.mxu0 0.0
    %235 = vmatpush1.msra.mxu0 0.0
    %236 = vmatprep.subr.mxu0 0.0
    %237 = vmatpush1.msra.mxu0 0.0
    %238 = vmatprep.subr.mxu0 0.0
    %239 = vmatpush1.msra.mxu0 0.0
    %240 = vmatprep.subr.mxu0 0.0
    %241 = vmatpush1.msra.mxu0 0.0
    %242 = vmatprep.subr.mxu0 0.0
    %243 = vmatpush1.msra.mxu0 0.0
    %244 = vmatprep.subr.mxu0 0.0
    %245 = vmatpush1.msra.mxu0 0.0
    %246 = vmatprep.subr.mxu0 0.0
    %247 = vmatpush1.msra.mxu0 0.0
    %248 = vmatprep.subr.mxu0 0.0
    %249 = vmatpush1.msra.mxu0 0.0
    %250 = vmatprep.subr.mxu0 0.0
    %251 = vmatpush1.msra.mxu0 0.0
    %252 = vmatprep.subr.mxu0 0.0
    %253 = vmatpush1.msra.mxu0 0.0
    %254 = vmatprep.subr.mxu0 0.0
    %255 = vmatpush1.msra.mxu0 0.0
    %256 = vmatprep.subr.mxu0 0.0
    %257 = vmatpush1.msra.mxu0 0.0
    %258 = vmatprep.subr.mxu0 0.0
    %259 = vmatpush1.msra.mxu0 0.0
    %260 = vmatprep.subr.mxu0 0.0
    %261 = vmatpush1.msra.mxu0 0.0
    %262 = vmatprep.subr.mxu0 0.0
    %263 = vmatpush1.msra.mxu0 0.0
    %264 = vmatprep.subr.mxu0 0.0
    %265 = vmatpush1.msra.mxu0 0.0
    %266 = vmatprep.subr.mxu0 0.0
    %267 = vmatpush1.msra.mxu0 0.0
    %268 = vmatprep.subr.mxu0 0.0
    %269 = vmatpush1.msra.mxu0 0.0
    %270 = vmatprep.subr.mxu0 0.0
    %271 = vmatpush1.msra.mxu0 0.0
    %272 = vmatprep.subr.mxu0 0.0
    %273 = vmatpush1.msra.mxu0 0.0
    %274 = vmatprep.subr.mxu0 0.0
    %275 = vmatpush1.msra.mxu0 0.0
    %276 = vmatprep.subr.mxu0 0.0
    %277 = vmatpush1.msra.mxu0 0.0
    %278 = vmatprep.subr.mxu0 0.0
    %279 = vmatpush1.msra.mxu0 0.0
    %280 = vmatprep.mubr.f32.mxu0 0.0
    %281 = vmatmul.mubr.f32.gmra.mrb[0].mxu0 %v214
    %v282 = vpop.f32.mrb[0].mxu0
    %v283 = vadd.f32 %v210, %v282
    %v284 = vpop.f32.mrb[0].mxu0
    %285 = vdwg.mxu0
    %v286 = vld [vmem:[%s4] sm:$0x1]
    %v287 = vld [vmem:[%s5] sm:$0x1]
    %288 = vmatprep.subr.mxu0 0.0
    %289 = vmatpush1.msra.mxu0 %v180
    %290 = vmatprep.subr.mxu0 0.0
    %291 = vmatpush1.msra.mxu0 %v181
    %292 = vmatprep.subr.mxu0 0.0
    %293 = vmatpush1.msra.mxu0 %v182
    %294 = vmatprep.subr.mxu0 0.0
    %295 = vmatpush1.msra.mxu0 %v183
    %296 = vmatprep.subr.mxu0 0.0
    %297 = vmatpush1.msra.mxu0 %v184
    %298 = vmatprep.subr.mxu0 0.0
    %299 = vmatpush1.msra.mxu0 %v185
    %300 = vmatprep.subr.mxu0 0.0
    %301 = vmatpush1.msra.mxu0 %v186
    %302 = vmatprep.subr.mxu0 0.0
    %303 = vmatpush1.msra.mxu0 %v187
    %304 = vmatprep.subr.mxu0 0.0
    %305 = vmatpush1.msra.mxu0 %v188
    %306 = vmatprep.subr.mxu0 0.0
    %307 = vmatpush1.msra.mxu0 %v189
    %308 = vmatprep.subr.mxu0 0.0
    %309 = vmatpush1.msra.mxu0 %v190
    %310 = vmatprep.subr.mxu0 0.0
    %311 = vmatpush1.msra.mxu0 %v191
    %312 = vmatprep.subr.mxu0 0.0
    %313 = vmatpush1.msra.mxu0 %v192
    %314 = vmatprep.subr.mxu0 0.0
    %315 = vmatpush1.msra.mxu0 %v193
    %316 = vmatprep.subr.mxu0 0.0
    %317 = vmatpush1.msra.mxu0 %v194
    %318 = vmatprep.subr.mxu0 0.0
    %319 = vmatpush1.msra.mxu0 %v195
    %320 = vmatprep.subr.mxu0 0.0
    %321 = vmatpush1.msra.mxu0 0.0
    %322 = vmatprep.subr.mxu0 0.0
    %323 = vmatpush1.msra.mxu0 0.0
    %324 = vmatprep.subr.mxu0 0.0
    %325 = vmatpush1.msra.mxu0 0.0
    %326 = vmatprep.subr.mxu0 0.0
    %327 = vmatpush1.msra.mxu0 0.0
    %328 = vmatprep.subr.mxu0 0.0
    %329 = vmatpush1.msra.mxu0 0.0
    %330 = vmatprep.subr.mxu0 0.0
    %331 = vmatpush1.msra.mxu0 0.0
    %332 = vmatprep.subr.mxu0 0.0
    %333 = vmatpush1.msra.mxu0 0.0
    %334 = vmatprep.subr.mxu0 0.0
    %335 = vmatpush1.msra.mxu0 0.0
    %336 = vmatprep.subr.mxu0 0.0
    %337 = vmatpush1.msra.mxu0 0.0
    %338 = vmatprep.subr.mxu0 0.0
    %339 = vmatpush1.msra.mxu0 0.0
    %340 = vmatprep.subr.mxu0 0.0
    %341 = vmatpush1.msra.mxu0 0.0
    %342 = vmatprep.subr.mxu0 0.0
    %343 = vmatpush1.msra.mxu0 0.0
    %344 = vmatprep.subr.mxu0 0.0
    %345 = vmatpush1.msra.mxu0 0.0
    %346 = vmatprep.subr.mxu0 0.0
    %347 = vmatpush1.msra.mxu0 0.0
    %348 = vmatprep.subr.mxu0 0.0
    %349 = vmatpush1.msra.mxu0 0.0
    %350 = vmatprep.subr.mxu0 0.0
    %351 = vmatpush1.msra.mxu0 0.0
    %352 = vmatprep.mubr.f32.mxu0 0.0
    %353 = vmatmul.mubr.f32.gmra.mrb[0].mxu0 %v283
    %v354 = vpop.f32.mrb[0].mxu0
    %v355 = vadd.f32 0.0, %v354
    %v356 = vpop.f32.mrb[0].mxu0
    %357 = vdwg.mxu0
    %v358 = vsub.f32 %v283, %v355
    %v359 = vmul.f32 %v358, %v358
    %360 = vmatprep.subr.mxu0 0.0
    %361 = vmatpush1.msra.mxu0 %v180
    %362 = vmatprep.subr.mxu0 0.0
    %363 = vmatpush1.msra.mxu0 %v181
    %364 = vmatprep.subr.mxu0 0.0
    %365 = vmatpush1.msra.mxu0 %v182
    %366 = vmatprep.subr.mxu0 0.0
    %367 = vmatpush1.msra.mxu0 %v183
    %368 = vmatprep.subr.mxu0 0.0
    %369 = vmatpush1.msra.mxu0 %v184
    %370 = vmatprep.subr.mxu0 0.0
    %371 = vmatpush1.msra.mxu0 %v185
    %372 = vmatprep.subr.mxu0 0.0
    %373 = vmatpush1.msra.mxu0 %v186
    %374 = vmatprep.subr.mxu0 0.0
    %375 = vmatpush1.msra.mxu0 %v187
    %376 = vmatprep.subr.mxu0 0.0
    %377 = vmatpush1.msra.mxu0 %v188
    %378 = vmatprep.subr.mxu0 0.0
    %379 = vmatpush1.msra.mxu0 %v189
    %380 = vmatprep.subr.mxu0 0.0
    %381 = vmatpush1.msra.mxu0 %v190
    %382 = vmatprep.subr.mxu0 0.0
    %383 = vmatpush1.msra.mxu0 %v191
    %384 = vmatprep.subr.mxu0 0.0
    %385 = vmatpush1.msra.mxu0 %v192
    %386 = vmatprep.subr.mxu0 0.0
    %387 = vmatpush1.msra.mxu0 %v193
    %388 = vmatprep.subr.mxu0 0.0
    %389 = vmatpush1.msra.mxu0 %v194
    %390 = vmatprep.subr.mxu0 0.0
    %391 = vmatpush1.msra.mxu0 %v195
    %392 = vmatprep.subr.mxu0 0.0
    %393 = vmatpush1.msra.mxu0 0.0
    %394 = vmatprep.subr.mxu0 0.0
    %395 = vmatpush1.msra.mxu0 0.0
    %396 = vmatprep.subr.mxu0 0.0
    %397 = vmatpush1.msra.mxu0 0.0
    %398 = vmatprep.subr.mxu0 0.0
    %399 = vmatpush1.msra.mxu0 0.0
    %400 = vmatprep.subr.mxu0 0.0
    %401 = vmatpush1.msra.mxu0 0.0
    %402 = vmatprep.subr.mxu0 0.0
    %403 = vmatpush1.msra.mxu0 0.0
    %404 = vmatprep.subr.mxu0 0.0
    %405 = vmatpush1.msra.mxu0 0.0
    %406 = vmatprep.subr.mxu0 0.0
    %407 = vmatpush1.msra.mxu0 0.0
    %408 = vmatprep.subr.mxu0 0.0
    %409 = vmatpush1.msra.mxu0 0.0
    %410 = vmatprep.subr.mxu0 0.0
    %411 = vmatpush1.msra.mxu0 0.0
    %412 = vmatprep.subr.mxu0 0.0
    %413 = vmatpush1.msra.mxu0 0.0
    %414 = vmatprep.subr.mxu0 0.0
    %415 = vmatpush1.msra.mxu0 0.0
    %416 = vmatprep.subr.mxu0 0.0
    %417 = vmatpush1.msra.mxu0 0.0
    %418 = vmatprep.subr.mxu0 0.0
    %419 = vmatpush1.msra.mxu0 0.0
    %420 = vmatprep.subr.mxu0 0.0
    %421 = vmatpush1.msra.mxu0 0.0
    %422 = vmatprep.subr.mxu0 0.0
    %423 = vmatpush1.msra.mxu0 0.0
    %424 = vmatprep.mubr.f32.mxu0 0.0
    %425 = vmatmul.mubr.f32.gmra.mrb[0].mxu0 %v359
    %v426 = vpop.f32.mrb[0].mxu0
    %v427 = vadd.f32 1e-05, %v426
    %v428 = vpop.f32.mrb[0].mxu0
    %429 = vdwg.mxu0
    %v430 = vrsqrt.pop %v427
    %v431 = vmul.f32 %v358, %v430
    %v433 = vlaneseq
    %v434 = vshrl.u32 %v433, 7
    %v435 = vsub.s32 0, %v434
    %v436 = vrot.slane %v286, %v435
    %v438 = vmul.f32 %v431, %v436
    %v440 = vlaneseq
    %v441 = vshrl.u32 %v440, 7
    %v442 = vsub.s32 0, %v441
    %v443 = vrot.slane %v287, %v442
    %v445 = vadd.f32 %v438, %v443
    %v446 = vld [vmem:[#allocation6] sm:$0xff]
    %v447 = vld [vmem:[#allocation6 + $0x8] sm:$0xff]
    %v448 = vld [vmem:[#allocation6 + $0x10] sm:$0xff]
    %v449 = vld [vmem:[#allocation6 + $0x18] sm:$0xff]
    %v450 = vld [vmem:[#allocation6 + $0x20] sm:$0xff]
    %v451 = vld [vmem:[#allocation6 + $0x28] sm:$0xff]
    %v452 = vld [vmem:[#allocation6 + $0x30] sm:$0xff]
    %v453 = vld [vmem:[#allocation6 + $0x38] sm:$0xff]
    %v454 = vld [vmem:[#allocation6 + $0x40] sm:$0xff]
    %v455 = vld [vmem:[#allocation6 + $0x48] sm:$0xff]
    %v456 = vld [vmem:[#allocation6 + $0x50] sm:$0xff]
    %v457 = vld [vmem:[#allocation6 + $0x58] sm:$0xff]
    %v458 = vld [vmem:[#allocation6 + $0x60] sm:$0xff]
    %v459 = vld [vmem:[#allocation6 + $0x68] sm:$0xff]
    %v460 = vld [vmem:[#allocation6 + $0x70] sm:$0xff]
    %v461 = vld [vmem:[#allocation6 + $0x78] sm:$0xff]
    %462 = vmatprep.subr.mxu0 0.0
    %463 = vmatpush1.msra.mxu0 %v446
    %464 = vmatprep.subr.mxu0 0.0
    %465 = vmatpush1.msra.mxu0 %v447
    %466 = vmatprep.subr.mxu0 0.0
    %467 = vmatpush1.msra.mxu0 %v448
    %468 = vmatprep.subr.mxu0 0.0
    %469 = vmatpush1.msra.mxu0 %v449
    %470 = vmatprep.subr.mxu0 0.0
    %471 = vmatpush1.msra.mxu0 %v450
    %472 = vmatprep.subr.mxu0 0.0
    %473 = vmatpush1.msra.mxu0 %v451
    %474 = vmatprep.subr.mxu0 0.0
    %475 = vmatpush1.msra.mxu0 %v452
    %476 = vmatprep.subr.mxu0 0.0
    %477 = vmatpush1.msra.mxu0 %v453
    %478 = vmatprep.subr.mxu0 0.0
    %479 = vmatpush1.msra.mxu0 %v454
    %480 = vmatprep.subr.mxu0 0.0
    %481 = vmatpush1.msra.mxu0 %v455
    %482 = vmatprep.subr.mxu0 0.0
    %483 = vmatpush1.msra.mxu0 %v456
    %484 = vmatprep.subr.mxu0 0.0
    %485 = vmatpush1.msra.mxu0 %v457
    %486 = vmatprep.subr.mxu0 0.0
    %487 = vmatpush1.msra.mxu0 %v458
    %488 = vmatprep.subr.mxu0 0.0
    %489 = vmatpush1.msra.mxu0 %v459
    %490 = vmatprep.subr.mxu0 0.0
    %491 = vmatpush1.msra.mxu0 %v460
    %492 = vmatprep.subr.mxu0 0.0
    %493 = vmatpush1.msra.mxu0 %v461
    %494 = vmatprep.subr.mxu0 0.0
    %495 = vmatpush1.msra.mxu0 0.0
    %496 = vmatprep.subr.mxu0 0.0
    %497 = vmatpush1.msra.mxu0 0.0
    %498 = vmatprep.subr.mxu0 0.0
    %499 = vmatpush1.msra.mxu0 0.0
    %500 = vmatprep.subr.mxu0 0.0
    %501 = vmatpush1.msra.mxu0 0.0
    %502 = vmatprep.subr.mxu0 0.0
    %503 = vmatpush1.msra.mxu0 0.0
    %504 = vmatprep.subr.mxu0 0.0
    %505 = vmatpush1.msra.mxu0 0.0
    %506 = vmatprep.subr.mxu0 0.0
    %507 = vmatpush1.msra.mxu0 0.0
    %508 = vmatprep.subr.mxu0 0.0
    %509 = vmatpush1.msra.mxu0 0.0
    %510 = vmatprep.subr.mxu0 0.0
    %511 = vmatpush1.msra.mxu0 0.0
    %512 = vmatprep.subr.mxu0 0.0
    %513 = vmatpush1.msra.mxu0 0.0
    %514 = vmatprep.subr.mxu0 0.0
    %515 = vmatpush1.msra.mxu0 0.0
    %516 = vmatprep.subr.mxu0 0.0
    %517 = vmatpush1.msra.mxu0 0.0
    %518 = vmatprep.subr.mxu0 0.0
    %519 = vmatpush1.msra.mxu0 0.0
    %520 = vmatprep.subr.mxu0 0.0
    %521 = vmatpush1.msra.mxu0 0.0
    %522 = vmatprep.subr.mxu0 0.0
    %523 = vmatpush1.msra.mxu0 0.0
    %524 = vmatprep.subr.mxu0 0.0
    %525 = vmatpush1.msra.mxu0 0.0
    %526 = vmatprep.mubr.f32.mxu0 0.0
    %527 = vmatmul.mubr.f32.gmra.mrb[0].mxu0 %v445
    %v528 = vpop.f32.mrb[0].mxu0
    %v529 = vadd.f32 0.0, %v528
    %v530 = vpop.f32.mrb[0].mxu0
    %531 = vdwg.mxu0
    %v532 = vmul.f32 %v529, 0.5
    %v533 = vmul.f32 %v529, 0.70710677
    %v534 = vand.u32 2147483647, %v533
    %v535 = vmul.f32 %v534, 0.3275911
    %v536 = vadd.f32 %v535, 1.0
    %v537 = vrcp.pop %v536
    %v538 = vmul.f32 1.0, %v537
    %v539 = vmul.f32 %v538, 1.0614054
    %v540 = vadd.f32 %v539, -1.4531521
    %v541 = vmul.f32 %v540, %v538
    %v542 = vadd.f32 %v541, 1.4214138
    %v543 = vmul.f32 %v542, %v538
    %v544 = vadd.f32 %v543, -0.28449672
    %v545 = vmul.f32 %v544, %v538
    %v546 = vadd.f32 %v545, 0.2548296
    %v547 = vmul.f32 %v546, %v538
    %v548 = vsub.f32 0.0, %v534
    %v549 = vmul.f32 %v548, %v534
    %v550 = vmul.f32 %v549, 1.442695
    %v551 = vpow.pop %v550
    %v552 = vmul.f32 %v547, %v551
    %v553 = vsub.f32 1.0, %v552
    %vm554 = vcmp.lt.f32.partialorder %v533, 0.0
    %v555 = vsub.f32 0.0, %v553
    %v556 = vsel %vm554, %v555, %v553
    %v557 = vadd.f32 %v556, 1.0
    %v558 = vmul.f32 %v532, %v557
    %v559 = vmul.f32 %v558, 0.5
    %v560 = vmul.f32 %v558, 0.70710677
    %v561 = vand.u32 2147483647, %v560
    %v562 = vmul.f32 %v561, 0.3275911
    %v563 = vadd.f32 %v562, 1.0
    %v564 = vrcp.pop %v563
    %v565 = vmul.f32 1.0, %v564
    %v566 = vmul.f32 %v565, 1.0614054
    %v567 = vadd.f32 %v566, -1.4531521
    %v568 = vmul.f32 %v567, %v565
    %v569 = vadd.f32 %v568, 1.4214138
    %v570 = vmul.f32 %v569, %v565
    %v571 = vadd.f32 %v570, -0.28449672
    %v572 = vmul.f32 %v571, %v565
    %v573 = vadd.f32 %v572, 0.2548296
    %v574 = vmul.f32 %v573, %v565
    %v575 = vsub.f32 0.0, %v561
    %v576 = vmul.f32 %v575, %v561
    %v577 = vmul.f32 %v576, 1.442695
    %v578 = vpow.pop %v577
    %v579 = vmul.f32 %v574, %v578
    %v580 = vsub.f32 1.0, %v579
    %vm581 = vcmp.lt.f32.partialorder %v560, 0.0
    %v582 = vsub.f32 0.0, %v580
    %v583 = vsel %vm581, %v582, %v580
    %v584 = vadd.f32 %v583, 1.0
    %v585 = vmul.f32 %v559, %v584
    %v586 = vld [vmem:[%s7] sm:$0xff]
    %v587 = vld [vmem:[%s7 + $0x8] sm:$0xff]
    %v588 = vld [vmem:[%s7 + $0x10] sm:$0xff]
    %v589 = vld [vmem:[%s7 + $0x18] sm:$0xff]
    %v590 = vld [vmem:[%s8] sm:$0xff]
    %v591 = vld [vmem:[%s8 + $0x8] sm:$0xff]
    %v592 = vld [vmem:[%s8 + $0x10] sm:$0xff]
    %v593 = vld [vmem:[%s8 + $0x18] sm:$0xff]
    %vm594 = vcmask 261120
    %v596 = vsel %vm594, %v585, 0
    %598 = vmatprep.subr.mxu0 0.0
    %599 = vmatpush1.msra.mxu0 %v590
    %600 = vmatprep.subr.mxu0 0.0
    %601 = vmatpush1.msra.mxu0 %v591
    %602 = vmatprep.subr.mxu0 0.0
    %603 = vmatpush1.msra.mxu0 %v592
    %604 = vmatprep.subr.mxu0 0.0
    %605 = vmatpush1.msra.mxu0 %v593
    %606 = vmatprep.subr.mxu0 0.0
    %607 = vmatpush1.msra.mxu0 0.0
    %608 = vmatprep.subr.mxu0 0.0
    %609 = vmatpush1.msra.mxu0 0.0
    %610 = vmatprep.subr.mxu0 0.0
    %611 = vmatpush1.msra.mxu0 0.0
    %612 = vmatprep.subr.mxu0 0.0
    %613 = vmatpush1.msra.mxu0 0.0
    %614 = vmatprep.subr.mxu0 0.0
    %615 = vmatpush1.msra.mxu0 0.0
    %616 = vmatprep.subr.mxu0 0.0
    %617 = vmatpush1.msra.mxu0 0.0
    %618 = vmatprep.subr.mxu0 0.0
    %619 = vmatpush1.msra.mxu0 0.0
    %620 = vmatprep.subr.mxu0 0.0
    %621 = vmatpush1.msra.mxu0 0.0
    %622 = vmatprep.subr.mxu0 0.0
    %623 = vmatpush1.msra.mxu0 0.0
    %624 = vmatprep.subr.mxu0 0.0
    %625 = vmatpush1.msra.mxu0 0.0
    %626 = vmatprep.subr.mxu0 0.0
    %627 = vmatpush1.msra.mxu0 0.0
    %628 = vmatprep.subr.mxu0 0.0
    %629 = vmatpush1.msra.mxu0 0.0
    %630 = vmatprep.subr.mxu0 0.0
    %631 = vmatpush1.msra.mxu0 0.0
    %632 = vmatprep.subr.mxu0 0.0
    %633 = vmatpush1.msra.mxu0 0.0
    %634 = vmatprep.subr.mxu0 0.0
    %635 = vmatpush1.msra.mxu0 0.0
    %636 = vmatprep.subr.mxu0 0.0
    %637 = vmatpush1.msra.mxu0 0.0
    %638 = vmatprep.subr.mxu0 0.0
    %639 = vmatpush1.msra.mxu0 0.0
    %640 = vmatprep.subr.mxu0 0.0
    %641 = vmatpush1.msra.mxu0 0.0
    %642 = vmatprep.subr.mxu0 0.0
    %643 = vmatpush1.msra.mxu0 0.0
    %644 = vmatprep.subr.mxu0 0.0
    %645 = vmatpush1.msra.mxu0 0.0
    %646 = vmatprep.subr.mxu0 0.0
    %647 = vmatpush1.msra.mxu0 0.0
    %648 = vmatprep.subr.mxu0 0.0
    %649 = vmatpush1.msra.mxu0 0.0
    %650 = vmatprep.subr.mxu0 0.0
    %651 = vmatpush1.msra.mxu0 0.0
    %652 = vmatprep.subr.mxu0 0.0
    %653 = vmatpush1.msra.mxu0 0.0
    %654 = vmatprep.subr.mxu0 0.0
    %655 = vmatpush1.msra.mxu0 0.0
    %656 = vmatprep.subr.mxu0 0.0
    %657 = vmatpush1.msra.mxu0 0.0
    %658 = vmatprep.subr.mxu0 0.0
    %659 = vmatpush1.msra.mxu0 0.0
    %660 = vmatprep.subr.mxu0 0.0
    %661 = vmatpush1.msra.mxu0 0.0
    %662 = vmatprep.mubr.f32.mxu0 0.0
    %663 = vmatmul.mubr.f32.gmra.mrb[0].mxu0 %v596
    %v664 = vpop.f32.mrb[0].mxu0
    %v665 = vadd.f32 0.0, %v664
    %v666 = vpop.f32.mrb[0].mxu0
    %667 = vdwg.mxu0
    %v668 = vmul.f32 %v665, 0.5
    %v669 = vmul.f32 %v665, 0.70710677
    %v670 = vand.u32 2147483647, %v669
    %v671 = vmul.f32 %v670, 0.3275911
    %v672 = vadd.f32 %v671, 1.0
    %v673 = vrcp.pop %v672
    %v674 = vmul.f32 1.0, %v673
    %v675 = vmul.f32 %v674, 1.0614054
    %v676 = vadd.f32 %v675, -1.4531521
    %v677 = vmul.f32 %v676, %v674
    %v678 = vadd.f32 %v677, 1.4214138
    %v679 = vmul.f32 %v678, %v674
    %v680 = vadd.f32 %v679, -0.28449672
    %v681 = vmul.f32 %v680, %v674
    %v682 = vadd.f32 %v681, 0.2548296
    %v683 = vmul.f32 %v682, %v674
    %v684 = vsub.f32 0.0, %v670
    %v685 = vmul.f32 %v684, %v670
    %v686 = vmul.f32 %v685, 1.442695
    %v687 = vpow.pop %v686
    %v688 = vmul.f32 %v683, %v687
    %v689 = vsub.f32 1.0, %v688
    %vm690 = vcmp.lt.f32.partialorder %v669, 0.0
    %v691 = vsub.f32 0.0, %v689
    %v692 = vsel %vm690, %v691, %v689
    %v693 = vadd.f32 %v692, 1.0
    %v694 = vmul.f32 %v668, %v693
    %v695 = vmul.f32 %v694, 0.5
    %v696 = vmul.f32 %v694, 0.70710677
    %v697 = vand.u32 2147483647, %v696
    %v698 = vmul.f32 %v697, 0.3275911
    %v699 = vadd.f32 %v698, 1.0
    %v700 = vrcp.pop %v699
    %v701 = vmul.f32 1.0, %v700
    %v702 = vmul.f32 %v701, 1.0614054
    %v703 = vadd.f32 %v702, -1.4531521
    %v704 = vmul.f32 %v703, %v701
    %v705 = vadd.f32 %v704, 1.4214138
    %v706 = vmul.f32 %v705, %v701
    %v707 = vadd.f32 %v706, -0.28449672
    %v708 = vmul.f32 %v707, %v701
    %v709 = vadd.f32 %v708, 0.2548296
    %v710 = vmul.f32 %v709, %v701
    %v711 = vsub.f32 0.0, %v697
    %v712 = vmul.f32 %v711, %v697
    %v713 = vmul.f32 %v712, 1.442695
    %v714 = vpow.pop %v713
    %v715 = vmul.f32 %v710, %v714
    %v716 = vsub.f32 1.0, %v715
    %vm717 = vcmp.lt.f32.partialorder %v696, 0.0
    %v718 = vsub.f32 0.0, %v716
    %v719 = vsel %vm717, %v718, %v716
    %v720 = vadd.f32 %v719, 1.0
    %v721 = vmul.f32 %v695, %v720
    %v722 = vld [vmem:[%s9] sm:$0xff]
    %vm723 = vcmask 64512
    %v725 = vsel %vm723, %v721, 0
    %727 = vmatprep.subr.mxu0 0.0
    %728 = vmatpush1.msra.mxu0 %v722
    %729 = vmatprep.subr.mxu0 0.0
    %730 = vmatpush1.msra.mxu0 0.0
    %731 = vmatprep.subr.mxu0 0.0
    %732 = vmatpush1.msra.mxu0 0.0
    %733 = vmatprep.subr.mxu0 0.0
    %734 = vmatpush1.msra.mxu0 0.0
    %735 = vmatprep.subr.mxu0 0.0
    %736 = vmatpush1.msra.mxu0 0.0
    %737 = vmatprep.subr.mxu0 0.0
    %738 = vmatpush1.msra.mxu0 0.0
    %739 = vmatprep.subr.mxu0 0.0
    %740 = vmatpush1.msra.mxu0 0.0
    %741 = vmatprep.subr.mxu0 0.0
    %742 = vmatpush1.msra.mxu0 0.0
    %743 = vmatprep.subr.mxu0 0.0
    %744 = vmatpush1.msra.mxu0 0.0
    %745 = vmatprep.subr.mxu0 0.0
    %746 = vmatpush1.msra.mxu0 0.0
    %747 = vmatprep.subr.mxu0 0.0
    %748 = vmatpush1.msra.mxu0 0.0
    %749 = vmatprep.subr.mxu0 0.0
    %750 = vmatpush1.msra.mxu0 0.0
    %751 = vmatprep.subr.mxu0 0.0
    %752 = vmatpush1.msra.mxu0 0.0
    %753 = vmatprep.subr.mxu0 0.0
    %754 = vmatpush1.msra.mxu0 0.0
    %755 = vmatprep.subr.mxu0 0.0
    %756 = vmatpush1.msra.mxu0 0.0
    %757 = vmatprep.subr.mxu0 0.0
    %758 = vmatpush1.msra.mxu0 0.0
    %759 = vmatprep.subr.mxu0 0.0
    %760 = vmatpush1.msra.mxu0 0.0
    %761 = vmatprep.subr.mxu0 0.0
    %762 = vmatpush1.msra.mxu0 0.0
    %763 = vmatprep.subr.mxu0 0.0
    %764 = vmatpush1.msra.mxu0 0.0
    %765 = vmatprep.subr.mxu0 0.0
    %766 = vmatpush1.msra.mxu0 0.0
    %767 = vmatprep.subr.mxu0 0.0
    %768 = vmatpush1.msra.mxu0 0.0
    %769 = vmatprep.subr.mxu0 0.0
    %770 = vmatpush1.msra.mxu0 0.0
    %771 = vmatprep.subr.mxu0 0.0
    %772 = vmatpush1.msra.mxu0 0.0
    %773 = vmatprep.subr.mxu0 0.0
    %774 = vmatpush1.msra.mxu0 0.0
    %775 = vmatprep.subr.mxu0 0.0
    %776 = vmatpush1.msra.mxu0 0.0
    %777 = vmatprep.subr.mxu0 0.0
    %778 = vmatpush1.msra.mxu0 0.0
    %779 = vmatprep.subr.mxu0 0.0
    %780 = vmatpush1.msra.mxu0 0.0
    %781 = vmatprep.subr.mxu0 0.0
    %782 = vmatpush1.msra.mxu0 0.0
    %783 = vmatprep.subr.mxu0 0.0
    %784 = vmatpush1.msra.mxu0 0.0
    %785 = vmatprep.subr.mxu0 0.0
    %786 = vmatpush1.msra.mxu0 0.0
    %787 = vmatprep.subr.mxu0 0.0
    %788 = vmatpush1.msra.mxu0 0.0
    %789 = vmatprep.subr.mxu0 0.0
    %790 = vmatpush1.msra.mxu0 0.0
    %791 = vmatprep.mubr.f32.mxu0 0.0
    %792 = vmatmul.mubr.f32.gmra.mrb[0].mxu0 %v725
    %v793 = vpop.f32.mrb[0].mxu0
    %v794 = vadd.f32 0.0, %v793
    %v795 = vpop.f32.mrb[0].mxu0
    %796 = vdwg.mxu0
    %797 = vmatprep.subr.mxu0 0.0
    %798 = vmatpush1.msra.mxu0 %v586
    %799 = vmatprep.subr.mxu0 0.0
    %800 = vmatpush1.msra.mxu0 %v587
    %801 = vmatprep.subr.mxu0 0.0
    %802 = vmatpush1.msra.mxu0 %v588
    %803 = vmatprep.subr.mxu0 0.0
    %804 = vmatpush1.msra.mxu0 %v589
    %805 = vmatprep.subr.mxu0 0.0
    %806 = vmatpush1.msra.mxu0 0.0
    %807 = vmatprep.subr.mxu0 0.0
    %808 = vmatpush1.msra.mxu0 0.0
    %809 = vmatprep.subr.mxu0 0.0
    %810 = vmatpush1.msra.mxu0 0.0
    %811 = vmatprep.subr.mxu0 0.0
    %812 = vmatpush1.msra.mxu0 0.0
    %813 = vmatprep.subr.mxu0 0.0
    %814 = vmatpush1.msra.mxu0 0.0
    %815 = vmatprep.subr.mxu0 0.0
    %816 = vmatpush1.msra.mxu0 0.0
    %817 = vmatprep.subr.mxu0 0.0
    %818 = vmatpush1.msra.mxu0 0.0
    %819 = vmatprep.subr.mxu0 0.0
    %820 = vmatpush1.msra.mxu0 0.0
    %821 = vmatprep.subr.mxu0 0.0
    %822 = vmatpush1.msra.mxu0 0.0
    %823 = vmatprep.subr.mxu0 0.0
    %824 = vmatpush1.msra.mxu0 0.0
    %825 = vmatprep.subr.mxu0 0.0
    %826 = vmatpush1.msra.mxu0 0.0
    %827 = vmatprep.subr.mxu0 0.0
    %828 = vmatpush1.msra.mxu0 0.0
    %829 = vmatprep.subr.mxu0 0.0
    %830 = vmatpush1.msra.mxu0 0.0
    %831 = vmatprep.subr.mxu0 0.0
    %832 = vmatpush1.msra.mxu0 0.0
    %833 = vmatprep.subr.mxu0 0.0
    %834 = vmatpush1.msra.mxu0 0.0
    %835 = vmatprep.subr.mxu0 0.0
    %836 = vmatpush1.msra.mxu0 0.0
    %837 = vmatprep.subr.mxu0 0.0
    %838 = vmatpush1.msra.mxu0 0.0
    %839 = vmatprep.subr.mxu0 0.0
    %840 = vmatpush1.msra.mxu0 0.0
    %841 = vmatprep.subr.mxu0 0.0
    %842 = vmatpush1.msra.mxu0 0.0
    %843 = vmatprep.subr.mxu0 0.0
    %844 = vmatpush1.msra.mxu0 0.0
    %845 = vmatprep.subr.mxu0 0.0
    %846 = vmatpush1.msra.mxu0 0.0
    %847 = vmatprep.subr.mxu0 0.0
    %848 = vmatpush1.msra.mxu0 0.0
    %849 = vmatprep.subr.mxu0 0.0
    %850 = vmatpush1.msra.mxu0 0.0
    %851 = vmatprep.subr.mxu0 0.0
    %852 = vmatpush1.msra.mxu0 0.0
    %853 = vmatprep.subr.mxu0 0.0
    %854 = vmatpush1.msra.mxu0 0.0
    %855 = vmatprep.subr.mxu0 0.0
    %856 = vmatpush1.msra.mxu0 0.0
    %857 = vmatprep.subr.mxu0 0.0
    %858 = vmatpush1.msra.mxu0 0.0
    %859 = vmatprep.subr.mxu0 0.0
    %860 = vmatpush1.msra.mxu0 0.0
    %861 = vmatprep.mubr.f32.mxu0 0.0
    %862 = vmatmul.mubr.f32.gmra.mrb[0].mxu0 %v596
    %v863 = vpop.f32.mrb[0].mxu0
    %v864 = vadd.f32 %v794, %v863
    %v865 = vpop.f32.mrb[0].mxu0
    %866 = vdwg.mxu0
    %v867 = vadd.f32 %v864, %v283
    %v868 = vld [vmem:[%s10] sm:$0x1]
    %v869 = vld [vmem:[%s11] sm:$0x1]
    %870 = vmatprep.subr.mxu0 0.0
    %871 = vmatpush1.msra.mxu0 %v180
    %872 = vmatprep.subr.mxu0 0.0
    %873 = vmatpush1.msra.mxu0 %v181
    %874 = vmatprep.subr.mxu0 0.0
    %875 = vmatpush1.msra.mxu0 %v182
    %876 = vmatprep.subr.mxu0 0.0
    %877 = vmatpush1.msra.mxu0 %v183
    %878 = vmatprep.subr.mxu0 0.0
    %879 = vmatpush1.msra.mxu0 %v184
    %880 = vmatprep.subr.mxu0 0.0
    %881 = vmatpush1.msra.mxu0 %v185
    %882 = vmatprep.subr.mxu0 0.0
    %883 = vmatpush1.msra.mxu0 %v186
    %884 = vmatprep.subr.mxu0 0.0
    %885 = vmatpush1.msra.mxu0 %v187
    %886 = vmatprep.subr.mxu0 0.0
    %887 = vmatpush1.msra.mxu0 %v188
    %888 = vmatprep.subr.mxu0 0.0
    %889 = vmatpush1.msra.mxu0 %v189
    %890 = vmatprep.subr.mxu0 0.0
    %891 = vmatpush1.msra.mxu0 %v190
    %892 = vmatprep.subr.mxu0 0.0
    %893 = vmatpush1.msra.mxu0 %v191
    %894 = vmatprep.subr.mxu0 0.0
    %895 = vmatpush1.msra.mxu0 %v192
    %896 = vmatprep.subr.mxu0 0.0
    %897 = vmatpush1.msra.mxu0 %v193
    %898 = vmatprep.subr.mxu0 0.0
    %899 = vmatpush1.msra.mxu0 %v194
    %900 = vmatprep.subr.mxu0 0.0
    %901 = vmatpush1.msra.mxu0 %v195
    %902 = vmatprep.subr.mxu0 0.0
    %903 = vmatpush1.msra.mxu0 0.0
    %904 = vmatprep.subr.mxu0 0.0
    %905 = vmatpush1.msra.mxu0 0.0
    %906 = vmatprep.subr.mxu0 0.0
    %907 = vmatpush1.msra.mxu0 0.0
    %908 = vmatprep.subr.mxu0 0.0
    %909 = vmatpush1.msra.mxu0 0.0
    %910 = vmatprep.subr.mxu0 0.0
    %911 = vmatpush1.msra.mxu0 0.0
    %912 = vmatprep.subr.mxu0 0.0
    %913 = vmatpush1.msra.mxu0 0.0
    %914 = vmatprep.subr.mxu0 0.0
    %915 = vmatpush1.msra.mxu0 0.0
    %916 = vmatprep.subr.mxu0 0.0
    %917 = vmatpush1.msra.mxu0 0.0
    %918 = vmatprep.subr.mxu0 0.0
    %919 = vmatpush1.msra.mxu0 0.0
    %920 = vmatprep.subr.mxu0 0.0
    %921 = vmatpush1.msra.mxu0 0.0
    %922 = vmatprep.subr.mxu0 0.0
    %923 = vmatpush1.msra.mxu0 0.0
    %924 = vmatprep.subr.mxu0 0.0
    %925 = vmatpush1.msra.mxu0 0.0
    %926 = vmatprep.subr.mxu0 0.0
    %927 = vmatpush1.msra.mxu0 0.0
    %928 = vmatprep.subr.mxu0 0.0
    %929 = vmatpush1.msra.mxu0 0.0
    %930 = vmatprep.subr.mxu0 0.0
    %931 = vmatpush1.msra.mxu0 0.0
    %932 = vmatprep.subr.mxu0 0.0
    %933 = vmatpush1.msra.mxu0 0.0
    %934 = vmatprep.mubr.f32.mxu0 0.0
    %935 = vmatmul.mubr.f32.gmra.mrb[0].mxu0 %v867
    %v936 = vpop.f32.mrb[0].mxu0
    %v937 = vadd.f32 0.0, %v936
    %v938 = vpop.f32.mrb[0].mxu0
    %939 = vdwg.mxu0
    %v940 = vsub.f32 %v867, %v937
    %v941 = vmul.f32 %v940, %v940
    %942 = vmatprep.subr.mxu0 0.0
    %943 = vmatpush1.msra.mxu0 %v180
    %944 = vmatprep.subr.mxu0 0.0
    %945 = vmatpush1.msra.mxu0 %v181
    %946 = vmatprep.subr.mxu0 0.0
    %947 = vmatpush1.msra.mxu0 %v182
    %948 = vmatprep.subr.mxu0 0.0
    %949 = vmatpush1.msra.mxu0 %v183
    %950 = vmatprep.subr.mxu0 0.0
    %951 = vmatpush1.msra.mxu0 %v184
    %952 = vmatprep.subr.mxu0 0.0
    %953 = vmatpush1.msra.mxu0 %v185
    %954 = vmatprep.subr.mxu0 0.0
    %955 = vmatpush1.msra.mxu0 %v186
    %956 = vmatprep.subr.mxu0 0.0
    %957 = vmatpush1.msra.mxu0 %v187
    %958 = vmatprep.subr.mxu0 0.0
    %959 = vmatpush1.msra.mxu0 %v188
    %960 = vmatprep.subr.mxu0 0.0
    %961 = vmatpush1.msra.mxu0 %v189
    %962 = vmatprep.subr.mxu0 0.0
    %963 = vmatpush1.msra.mxu0 %v190
    %964 = vmatprep.subr.mxu0 0.0
    %965 = vmatpush1.msra.mxu0 %v191
    %966 = vmatprep.subr.mxu0 0.0
    %967 = vmatpush1.msra.mxu0 %v192
    %968 = vmatprep.subr.mxu0 0.0
    %969 = vmatpush1.msra.mxu0 %v193
    %970 = vmatprep.subr.mxu0 0.0
    %971 = vmatpush1.msra.mxu0 %v194
    %972 = vmatprep.subr.mxu0 0.0
    %973 = vmatpush1.msra.mxu0 %v195
    %974 = vmatprep.subr.mxu0 0.0
    %975 = vmatpush1.msra.mxu0 0.0
    %976 = vmatprep.subr.mxu0 0.0
    %977 = vmatpush1.msra.mxu0 0.0
    %978 = vmatprep.subr.mxu0 0.0
    %979 = vmatpush1.msra.mxu0 0.0
    %980 = vmatprep.subr.mxu0 0.0
    %981 = vmatpush1.msra.mxu0 0.0
    %982 = vmatprep.subr.mxu0 0.0
    %983 = vmatpush1.msra.mxu0 0.0
    %984 = vmatprep.subr.mxu0 0.0
    %985 = vmatpush1.msra.mxu0 0.0
    %986 = vmatprep.subr.mxu0 0.0
    %987 = vmatpush1.msra.mxu0 0.0
    %988 = vmatprep.subr.mxu0 0.0
    %989 = vmatpush1.msra.mxu0 0.0
    %990 = vmatprep.subr.mxu0 0.0
    %991 = vmatpush1.msra.mxu0 0.0
    %992 = vmatprep.subr.mxu0 0.0
    %993 = vmatpush1.msra.mxu0 0.0
    %994 = vmatprep.subr.mxu0 0.0
    %995 = vmatpush1.msra.mxu0 0.0
    %996 = vmatprep.subr.mxu0 0.0
    %997 = vmatpush1.msra.mxu0 0.0
    %998 = vmatprep.subr.mxu0 0.0
    %999 = vmatpush1.msra.mxu0 0.0
    %1000 = vmatprep.subr.mxu0 0.0
    %1001 = vmatpush1.msra.mxu0 0.0
    %1002 = vmatprep.subr.mxu0 0.0
    %1003 = vmatpush1.msra.mxu0 0.0
    %1004 = vmatprep.subr.mxu0 0.0
    %1005 = vmatpush1.msra.mxu0 0.0
    %1006 = vmatprep.mubr.f32.mxu0 0.0
    %1007 = vmatmul.mubr.f32.gmra.mrb[0].mxu0 %v941
    %v1008 = vpop.f32.mrb[0].mxu0
    %v1009 = vadd.f32 1e-05, %v1008
    %v1010 = vpop.f32.mrb[0].mxu0
    %1011 = vdwg.mxu0
    %v1012 = vrsqrt.pop %v1009
    %v1013 = vmul.f32 %v940, %v1012
    %v1015 = vlaneseq
    %v1016 = vshrl.u32 %v1015, 7
    %v1017 = vsub.s32 0, %v1016
    %v1018 = vrot.slane %v868, %v1017
    %v1020 = vmul.f32 %v1013, %v1018
    %v1022 = vlaneseq
    %v1023 = vshrl.u32 %v1022, 7
    %v1024 = vsub.s32 0, %v1023
    %v1025 = vrot.slane %v869, %v1024
    %v1027 = vadd.f32 %v1020, %v1025
    %v1028 = vld [vmem:[#allocation7] sm:$0xff]
    %v1029 = vld [vmem:[#allocation7 + $0x8] sm:$0xff]
    %v1030 = vld [vmem:[#allocation7 + $0x10] sm:$0xff]
    %v1031 = vld [vmem:[#allocation7 + $0x18] sm:$0xff]
    %v1032 = vld [vmem:[#allocation7 + $0x20] sm:$0xff]
    %v1033 = vld [vmem:[#allocation7 + $0x28] sm:$0xff]
    %v1034 = vld [vmem:[#allocation7 + $0x30] sm:$0xff]
    %v1035 = vld [vmem:[#allocation7 + $0x38] sm:$0xff]
    %v1036 = vld [vmem:[#allocation7 + $0x40] sm:$0xff]
    %v1037 = vld [vmem:[#allocation7 + $0x48] sm:$0xff]
    %v1038 = vld [vmem:[#allocation7 + $0x50] sm:$0xff]
    %v1039 = vld [vmem:[#allocation7 + $0x58] sm:$0xff]
    %v1040 = vld [vmem:[#allocation7 + $0x60] sm:$0xff]
    %v1041 = vld [vmem:[#allocation7 + $0x68] sm:$0xff]
    %v1042 = vld [vmem:[#allocation7 + $0x70] sm:$0xff]
    %v1043 = vld [vmem:[#allocation7 + $0x78] sm:$0xff]
    %1044 = vmatprep.subr.mxu0 0.0
    %1045 = vmatpush1.msra.mxu0 %v1028
    %1046 = vmatprep.subr.mxu0 0.0
    %1047 = vmatpush1.msra.mxu0 %v1029
    %1048 = vmatprep.subr.mxu0 0.0
    %1049 = vmatpush1.msra.mxu0 %v1030
    %1050 = vmatprep.subr.mxu0 0.0
    %1051 = vmatpush1.msra.mxu0 %v1031
    %1052 = vmatprep.subr.mxu0 0.0
    %1053 = vmatpush1.msra.mxu0 %v1032
    %1054 = vmatprep.subr.mxu0 0.0
    %1055 = vmatpush1.msra.mxu0 %v1033
    %1056 = vmatprep.subr.mxu0 0.0
    %1057 = vmatpush1.msra.mxu0 %v1034
    %1058 = vmatprep.subr.mxu0 0.0
    %1059 = vmatpush1.msra.mxu0 %v1035
    %1060 = vmatprep.subr.mxu0 0.0
    %1061 = vmatpush1.msra.mxu0 %v1036
    %1062 = vmatprep.subr.mxu0 0.0
    %1063 = vmatpush1.msra.mxu0 %v1037
    %1064 = vmatprep.subr.mxu0 0.0
    %1065 = vmatpush1.msra.mxu0 %v1038
    %1066 = vmatprep.subr.mxu0 0.0
    %1067 = vmatpush1.msra.mxu0 %v1039
    %1068 = vmatprep.subr.mxu0 0.0
    %1069 = vmatpush1.msra.mxu0 %v1040
    %1070 = vmatprep.subr.mxu0 0.0
    %1071 = vmatpush1.msra.mxu0 %v1041
    %1072 = vmatprep.subr.mxu0 0.0
    %1073 = vmatpush1.msra.mxu0 %v1042
    %1074 = vmatprep.subr.mxu0 0.0
    %1075 = vmatpush1.msra.mxu0 %v1043
    %1076 = vmatprep.subr.mxu0 0.0
    %1077 = vmatpush1.msra.mxu0 0.0
    %1078 = vmatprep.subr.mxu0 0.0
    %1079 = vmatpush1.msra.mxu0 0.0
    %1080 = vmatprep.subr.mxu0 0.0
    %1081 = vmatpush1.msra.mxu0 0.0
    %1082 = vmatprep.subr.mxu0 0.0
    %1083 = vmatpush1.msra.mxu0 0.0
    %1084 = vmatprep.subr.mxu0 0.0
    %1085 = vmatpush1.msra.mxu0 0.0
    %1086 = vmatprep.subr.mxu0 0.0
    %1087 = vmatpush1.msra.mxu0 0.0
    %1088 = vmatprep.subr.mxu0 0.0
    %1089 = vmatpush1.msra.mxu0 0.0
    %1090 = vmatprep.subr.mxu0 0.0
    %1091 = vmatpush1.msra.mxu0 0.0
    %1092 = vmatprep.subr.mxu0 0.0
    %1093 = vmatpush1.msra.mxu0 0.0
    %1094 = vmatprep.subr.mxu0 0.0
    %1095 = vmatpush1.msra.mxu0 0.0
    %1096 = vmatprep.subr.mxu0 0.0
    %1097 = vmatpush1.msra.mxu0 0.0
    %1098 = vmatprep.subr.mxu0 0.0
    %1099 = vmatpush1.msra.mxu0 0.0
    %1100 = vmatprep.subr.mxu0 0.0
    %1101 = vmatpush1.msra.mxu0 0.0
    %1102 = vmatprep.subr.mxu0 0.0
    %1103 = vmatpush1.msra.mxu0 0.0
    %1104 = vmatprep.subr.mxu0 0.0
    %1105 = vmatpush1.msra.mxu0 0.0
    %1106 = vmatprep.subr.mxu0 0.0
    %1107 = vmatpush1.msra.mxu0 0.0
    %1108 = vmatprep.mubr.f32.mxu0 0.0
    %1109 = vmatmul.mubr.f32.gmra.mrb[0].mxu0 %v1027
    %v1110 = vpop.f32.mrb[0].mxu0
    %v1111 = vadd.f32 0.0, %v1110
    %v1112 = vpop.f32.mrb[0].mxu0
    %1113 = vdwg.mxu0
    %v1114 = vmul.f32 %v1111, 0.5
    %v1115 = vmul.f32 %v1111, 0.70710677
    %v1116 = vand.u32 2147483647, %v1115
    %v1117 = vmul.f32 %v1116, 0.3275911
    %v1118 = vadd.f32 %v1117, 1.0
    %v1119 = vrcp.pop %v1118
    %v1120 = vmul.f32 1.0, %v1119
    %v1121 = vmul.f32 %v1120, 1.0614054
    %v1122 = vadd.f32 %v1121, -1.4531521
    %v1123 = vmul.f32 %v1122, %v1120
    %v1124 = vadd.f32 %v1123, 1.4214138
    %v1125 = vmul.f32 %v1124, %v1120
    %v1126 = vadd.f32 %v1125, -0.28449672
    %v1127 = vmul.f32 %v1126, %v1120
    %v1128 = vadd.f32 %v1127, 0.2548296
    %v1129 = vmul.f32 %v1128, %v1120
    %v1130 = vsub.f32 0.0, %v1116
    %v1131 = vmul.f32 %v1130, %v1116
    %v1132 = vmul.f32 %v1131, 1.442695
    %v1133 = vpow.pop %v1132
    %v1134 = vmul.f32 %v1129, %v1133
    %v1135 = vsub.f32 1.0, %v1134
    %vm1136 = vcmp.lt.f32.partialorder %v1115, 0.0
    %v1137 = vsub.f32 0.0, %v1135
    %v1138 = vsel %vm1136, %v1137, %v1135
    %v1139 = vadd.f32 %v1138, 1.0
    %v1140 = vmul.f32 %v1114, %v1139
    %v1141 = vmul.f32 %v1140, 0.5
    %v1142 = vmul.f32 %v1140, 0.70710677
    %v1143 = vand.u32 2147483647, %v1142
    %v1144 = vmul.f32 %v1143, 0.3275911
    %v1145 = vadd.f32 %v1144, 1.0
    %v1146 = vrcp.pop %v1145
    %v1147 = vmul.f32 1.0, %v1146
    %v1148 = vmul.f32 %v1147, 1.0614054
    %v1149 = vadd.f32 %v1148, -1.4531521
    %v1150 = vmul.f32 %v1149, %v1147
    %v1151 = vadd.f32 %v1150, 1.4214138
    %v1152 = vmul.f32 %v1151, %v1147
    %v1153 = vadd.f32 %v1152, -0.28449672
    %v1154 = vmul.f32 %v1153, %v1147
    %v1155 = vadd.f32 %v1154, 0.2548296
    %v1156 = vmul.f32 %v1155, %v1147
    %v1157 = vsub.f32 0.0, %v1143
    %v1158 = vmul.f32 %v1157, %v1143
    %v1159 = vmul.f32 %v1158, 1.442695
    %v1160 = vpow.pop %v1159
    %v1161 = vmul.f32 %v1156, %v1160
    %v1162 = vsub.f32 1.0, %v1161
    %vm1163 = vcmp.lt.f32.partialorder %v1142, 0.0
    %v1164 = vsub.f32 0.0, %v1162
    %v1165 = vsel %vm1163, %v1164, %v1162
    %v1166 = vadd.f32 %v1165, 1.0
    %v1167 = vmul.f32 %v1141, %v1166
    %v1168 = vld [vmem:[#allocation9] sm:$0xff]
    %v1169 = vld [vmem:[#allocation9 + $0x8] sm:$0xff]
    %v1170 = vld [vmem:[#allocation9 + $0x10] sm:$0xff]
    %v1171 = vld [vmem:[#allocation9 + $0x18] sm:$0xff]
    %v1172 = vld [vmem:[#allocation10] sm:$0xff]
    %v1173 = vld [vmem:[#allocation10 + $0x8] sm:$0xff]
    %v1174 = vld [vmem:[#allocation10 + $0x10] sm:$0xff]
    %v1175 = vld [vmem:[#allocation10 + $0x18] sm:$0xff]
    %v1177 = vsel %vm594, %v1167, 0
    %1179 = vmatprep.subr.mxu0 0.0
    %1180 = vmatpush1.msra.mxu0 %v1172
    %1181 = vmatprep.subr.mxu0 0.0
    %1182 = vmatpush1.msra.mxu0 %v1173
    %1183 = vmatprep.subr.mxu0 0.0
    %1184 = vmatpush1.msra.mxu0 %v1174
    %1185 = vmatprep.subr.mxu0 0.0
    %1186 = vmatpush1.msra.mxu0 %v1175
    %1187 = vmatprep.subr.mxu0 0.0
    %1188 = vmatpush1.msra.mxu0 0.0
    %1189 = vmatprep.subr.mxu0 0.0
    %1190 = vmatpush1.msra.mxu0 0.0
    %1191 = vmatprep.subr.mxu0 0.0
    %1192 = vmatpush1.msra.mxu0 0.0
    %1193 = vmatprep.subr.mxu0 0.0
    %1194 = vmatpush1.msra.mxu0 0.0
    %1195 = vmatprep.subr.mxu0 0.0
    %1196 = vmatpush1.msra.mxu0 0.0
    %1197 = vmatprep.subr.mxu0 0.0
    %1198 = vmatpush1.msra.mxu0 0.0
    %1199 = vmatprep.subr.mxu0 0.0
    %1200 = vmatpush1.msra.mxu0 0.0
    %1201 = vmatprep.subr.mxu0 0.0
    %1202 = vmatpush1.msra.mxu0 0.0
    %1203 = vmatprep.subr.mxu0 0.0
    %1204 = vmatpush1.msra.mxu0 0.0
    %1205 = vmatprep.subr.mxu0 0.0
    %1206 = vmatpush1.msra.mxu0 0.0
    %1207 = vmatprep.subr.mxu0 0.0
    %1208 = vmatpush1.msra.mxu0 0.0
    %1209 = vmatprep.subr.mxu0 0.0
    %1210 = vmatpush1.msra.mxu0 0.0
    %1211 = vmatprep.subr.mxu0 0.0
    %1212 = vmatpush1.msra.mxu0 0.0
    %1213 = vmatprep.subr.mxu0 0.0
    %1214 = vmatpush1.msra.mxu0 0.0
    %1215 = vmatprep.subr.mxu0 0.0
    %1216 = vmatpush1.msra.mxu0 0.0
    %1217 = vmatprep.subr.mxu0 0.0
    %1218 = vmatpush1.msra.mxu0 0.0
    %1219 = vmatprep.subr.mxu0 0.0
    %1220 = vmatpush1.msra.mxu0 0.0
    %1221 = vmatprep.subr.mxu0 0.0
    %1222 = vmatpush1.msra.mxu0 0.0
    %1223 = vmatprep.subr.mxu0 0.0
    %1224 = vmatpush1.msra.mxu0 0.0
    %1225 = vmatprep.subr.mxu0 0.0
    %1226 = vmatpush1.msra.mxu0 0.0
    %1227 = vmatprep.subr.mxu0 0.0
    %1228 = vmatpush1.msra.mxu0 0.0
    %1229 = vmatprep.subr.mxu0 0.0
    %1230 = vmatpush1.msra.mxu0 0.0
    %1231 = vmatprep.subr.mxu0 0.0
    %1232 = vmatpush1.msra.mxu0 0.0
    %1233 = vmatprep.subr.mxu0 0.0
    %1234 = vmatpush1.msra.mxu0 0.0
    %1235 = vmatprep.subr.mxu0 0.0
    %1236 = vmatpush1.msra.mxu0 0.0
    %1237 = vmatprep.subr.mxu0 0.0
    %1238 = vmatpush1.msra.mxu0 0.0
    %1239 = vmatprep.subr.mxu0 0.0
    %1240 = vmatpush1.msra.mxu0 0.0
    %1241 = vmatprep.subr.mxu0 0.0
    %1242 = vmatpush1.msra.mxu0 0.0
    %1243 = vmatprep.mubr.f32.mxu0 0.0
    %1244 = vmatmul.mubr.f32.gmra.mrb[0].mxu0 %v1177
    %v1245 = vpop.f32.mrb[0].mxu0
    %v1246 = vadd.f32 0.0, %v1245
    %v1247 = vpop.f32.mrb[0].mxu0
    %1248 = vdwg.mxu0
    %v1249 = vmul.f32 %v1246, 0.5
    %v1250 = vmul.f32 %v1246, 0.70710677
    %v1251 = vand.u32 2147483647, %v1250
    %v1252 = vmul.f32 %v1251, 0.3275911
    %v1253 = vadd.f32 %v1252, 1.0
    %v1254 = vrcp.pop %v1253
    %v1255 = vmul.f32 1.0, %v1254
    %v1256 = vmul.f32 %v1255, 1.0614054
    %v1257 = vadd.f32 %v1256, -1.4531521
    %v1258 = vmul.f32 %v1257, %v1255
    %v1259 = vadd.f32 %v1258, 1.4214138
    %v1260 = vmul.f32 %v1259, %v1255
    %v1261 = vadd.f32 %v1260, -0.28449672
    %v1262 = vmul.f32 %v1261, %v1255
    %v1263 = vadd.f32 %v1262, 0.2548296
    %v1264 = vmul.f32 %v1263, %v1255
    %v1265 = vsub.f32 0.0, %v1251
    %v1266 = vmul.f32 %v1265, %v1251
    %v1267 = vmul.f32 %v1266, 1.442695
    %v1268 = vpow.pop %v1267
    %v1269 = vmul.f32 %v1264, %v1268
    %v1270 = vsub.f32 1.0, %v1269
    %vm1271 = vcmp.lt.f32.partialorder %v1250, 0.0
    %v1272 = vsub.f32 0.0, %v1270
    %v1273 = vsel %vm1271, %v1272, %v1270
    %v1274 = vadd.f32 %v1273, 1.0
    %v1275 = vmul.f32 %v1249, %v1274
    %v1276 = vmul.f32 %v1275, 0.5
    %v1277 = vmul.f32 %v1275, 0.70710677
    %v1278 = vand.u32 2147483647, %v1277
    %v1279 = vmul.f32 %v1278, 0.3275911
    %v1280 = vadd.f32 %v1279, 1.0
    %v1281 = vrcp.pop %v1280
    %v1282 = vmul.f32 1.0, %v1281
    %v1283 = vmul.f32 %v1282, 1.0614054
    %v1284 = vadd.f32 %v1283, -1.4531521
    %v1285 = vmul.f32 %v1284, %v1282
    %v1286 = vadd.f32 %v1285, 1.4214138
    %v1287 = vmul.f32 %v1286, %v1282
    %v1288 = vadd.f32 %v1287, -0.28449672
    %v1289 = vmul.f32 %v1288, %v1282
    %v1290 = vadd.f32 %v1289, 0.2548296
    %v1291 = vmul.f32 %v1290, %v1282
    %v1292 = vsub.f32 0.0, %v1278
    %v1293 = vmul.f32 %v1292, %v1278
    %v1294 = vmul.f32 %v1293, 1.442695
    %v1295 = vpow.pop %v1294
    %v1296 = vmul.f32 %v1291, %v1295
    %v1297 = vsub.f32 1.0, %v1296
    %vm1298 = vcmp.lt.f32.partialorder %v1277, 0.0
    %v1299 = vsub.f32 0.0, %v1297
    %v1300 = vsel %vm1298, %v1299, %v1297
    %v1301 = vadd.f32 %v1300, 1.0
    %v1302 = vmul.f32 %v1276, %v1301
    %v1303 = vld [vmem:[%s15] sm:$0xff]
    %v1305 = vsel %vm723, %v1302, 0
    %1307 = vmatprep.subr.mxu0 0.0
    %1308 = vmatpush1.msra.mxu0 %v1303
    %1309 = vmatprep.subr.mxu0 0.0
    %1310 = vmatpush1.msra.mxu0 0.0
    %1311 = vmatprep.subr.mxu0 0.0
    %1312 = vmatpush1.msra.mxu0 0.0
    %1313 = vmatprep.subr.mxu0 0.0
    %1314 = vmatpush1.msra.mxu0 0.0
    %1315 = vmatprep.subr.mxu0 0.0
    %1316 = vmatpush1.msra.mxu0 0.0
    %1317 = vmatprep.subr.mxu0 0.0
    %1318 = vmatpush1.msra.mxu0 0.0
    %1319 = vmatprep.subr.mxu0 0.0
    %1320 = vmatpush1.msra.mxu0 0.0
    %1321 = vmatprep.subr.mxu0 0.0
    %1322 = vmatpush1.msra.mxu0 0.0
    %1323 = vmatprep.subr.mxu0 0.0
    %1324 = vmatpush1.msra.mxu0 0.0
    %1325 = vmatprep.subr.mxu0 0.0
    %1326 = vmatpush1.msra.mxu0 0.0
    %1327 = vmatprep.subr.mxu0 0.0
    %1328 = vmatpush1.msra.mxu0 0.0
    %1329 = vmatprep.subr.mxu0 0.0
    %1330 = vmatpush1.msra.mxu0 0.0
    %1331 = vmatprep.subr.mxu0 0.0
    %1332 = vmatpush1.msra.mxu0 0.0
    %1333 = vmatprep.subr.mxu0 0.0
    %1334 = vmatpush1.msra.mxu0 0.0
    %1335 = vmatprep.subr.mxu0 0.0
    %1336 = vmatpush1.msra.mxu0 0.0
    %1337 = vmatprep.subr.mxu0 0.0
    %1338 = vmatpush1.msra.mxu0 0.0
    %1339 = vmatprep.subr.mxu0 0.0
    %1340 = vmatpush1.msra.mxu0 0.0
    %1341 = vmatprep.subr.mxu0 0.0
    %1342 = vmatpush1.msra.mxu0 0.0
    %1343 = vmatprep.subr.mxu0 0.0
    %1344 = vmatpush1.msra.mxu0 0.0
    %1345 = vmatprep.subr.mxu0 0.0
    %1346 = vmatpush1.msra.mxu0 0.0
    %1347 = vmatprep.subr.mxu0 0.0
    %1348 = vmatpush1.msra.mxu0 0.0
    %1349 = vmatprep.subr.mxu0 0.0
    %1350 = vmatpush1.msra.mxu0 0.0
    %1351 = vmatprep.subr.mxu0 0.0
    %1352 = vmatpush1.msra.mxu0 0.0
    %1353 = vmatprep.subr.mxu0 0.0
    %1354 = vmatpush1.msra.mxu0 0.0
    %1355 = vmatprep.subr.mxu0 0.0
    %1356 = vmatpush1.msra.mxu0 0.0
    %1357 = vmatprep.subr.mxu0 0.0
    %1358 = vmatpush1.msra.mxu0 0.0
    %1359 = vmatprep.subr.mxu0 0.0
    %1360 = vmatpush1.msra.mxu0 0.0
    %1361 = vmatprep.subr.mxu0 0.0
    %1362 = vmatpush1.msra.mxu0 0.0
    %1363 = vmatprep.subr.mxu0 0.0
    %1364 = vmatpush1.msra.mxu0 0.0
    %1365 = vmatprep.subr.mxu0 0.0
    %1366 = vmatpush1.msra.mxu0 0.0
    %1367 = vmatprep.subr.mxu0 0.0
    %1368 = vmatpush1.msra.mxu0 0.0
    %1369 = vmatprep.subr.mxu0 0.0
    %1370 = vmatpush1.msra.mxu0 0.0
    %1371 = vmatprep.mubr.f32.mxu0 0.0
    %1372 = vmatmul.mubr.f32.gmra.mrb[0].mxu0 %v1305
    %v1373 = vpop.f32.mrb[0].mxu0
    %v1374 = vadd.f32 0.0, %v1373
    %v1375 = vpop.f32.mrb[0].mxu0
    %1376 = vdwg.mxu0
    %1377 = vmatprep.subr.mxu0 0.0
    %1378 = vmatpush1.msra.mxu0 %v1168
    %1379 = vmatprep.subr.mxu0 0.0
    %1380 = vmatpush1.msra.mxu0 %v1169
    %1381 = vmatprep.subr.mxu0 0.0
    %1382 = vmatpush1.msra.mxu0 %v1170
    %1383 = vmatprep.subr.mxu0 0.0
    %1384 = vmatpush1.msra.mxu0 %v1171
    %1385 = vmatprep.subr.mxu0 0.0
    %1386 = vmatpush1.msra.mxu0 0.0
    %1387 = vmatprep.subr.mxu0 0.0
    %1388 = vmatpush1.msra.mxu0 0.0
    %1389 = vmatprep.subr.mxu0 0.0
    %1390 = vmatpush1.msra.mxu0 0.0
    %1391 = vmatprep.subr.mxu0 0.0
    %1392 = vmatpush1.msra.mxu0 0.0
    %1393 = vmatprep.subr.mxu0 0.0
    %1394 = vmatpush1.msra.mxu0 0.0
    %1395 = vmatprep.subr.mxu0 0.0
    %1396 = vmatpush1.msra.mxu0 0.0
    %1397 = vmatprep.subr.mxu0 0.0
    %1398 = vmatpush1.msra.mxu0 0.0
    %1399 = vmatprep.subr.mxu0 0.0
    %1400 = vmatpush1.msra.mxu0 0.0
    %1401 = vmatprep.subr.mxu0 0.0
    %1402 = vmatpush1.msra.mxu0 0.0
    %1403 = vmatprep.subr.mxu0 0.0
    %1404 = vmatpush1.msra.mxu0 0.0
    %1405 = vmatprep.subr.mxu0 0.0
    %1406 = vmatpush1.msra.mxu0 0.0
    %1407 = vmatprep.subr.mxu0 0.0
    %1408 = vmatpush1.msra.mxu0 0.0
    %1409 = vmatprep.subr.mxu0 0.0
    %1410 = vmatpush1.msra.mxu0 0.0
    %1411 = vmatprep.subr.mxu0 0.0
    %1412 = vmatpush1.msra.mxu0 0.0
    %1413 = vmatprep.subr.mxu0 0.0
    %1414 = vmatpush1.msra.mxu0 0.0
    %1415 = vmatprep.subr.mxu0 0.0
    %1416 = vmatpush1.msra.mxu0 0.0
    %1417 = vmatprep.subr.mxu0 0.0
    %1418 = vmatpush1.msra.mxu0 0.0
    %1419 = vmatprep.subr.mxu0 0.0
    %1420 = vmatpush1.msra.mxu0 0.0
    %1421 = vmatprep.subr.mxu0 0.0
    %1422 = vmatpush1.msra.mxu0 0.0
    %1423 = vmatprep.subr.mxu0 0.0
    %1424 = vmatpush1.msra.mxu0 0.0
    %1425 = vmatprep.subr.mxu0 0.0
    %1426 = vmatpush1.msra.mxu0 0.0
    %1427 = vmatprep.subr.mxu0 0.0
    %1428 = vmatpush1.msra.mxu0 0.0
    %1429 = vmatprep.subr.mxu0 0.0
    %1430 = vmatpush1.msra.mxu0 0.0
    %1431 = vmatprep.subr.mxu0 0.0
    %1432 = vmatpush1.msra.mxu0 0.0
    %1433 = vmatprep.subr.mxu0 0.0
    %1434 = vmatpush1.msra.mxu0 0.0
    %1435 = vmatprep.subr.mxu0 0.0
    %1436 = vmatpush1.msra.mxu0 0.0
    %1437 = vmatprep.subr.mxu0 0.0
    %1438 = vmatpush1.msra.mxu0 0.0
    %1439 = vmatprep.subr.mxu0 0.0
    %1440 = vmatpush1.msra.mxu0 0.0
    %1441 = vmatprep.mubr.f32.mxu0 0.0
    %1442 = vmatmul.mubr.f32.gmra.mrb[0].mxu0 %v1177
    %v1443 = vpop.f32.mrb[0].mxu0
    %v1444 = vadd.f32 %v1374, %v1443
    %v1445 = vpop.f32.mrb[0].mxu0
    %1446 = vdwg.mxu0
    %v1447 = vadd.f32 %v1444, %v867
    %v1448 = vld [vmem:[%s16] sm:$0x1]
    %v1449 = vld [vmem:[%s17] sm:$0x1]
    %1450 = vmatprep.subr.mxu0 0.0
    %1451 = vmatpush1.msra.mxu0 %v180
    %1452 = vmatprep.subr.mxu0 0.0
    %1453 = vmatpush1.msra.mxu0 %v181
    %1454 = vmatprep.subr.mxu0 0.0
    %1455 = vmatpush1.msra.mxu0 %v182
    %1456 = vmatprep.subr.mxu0 0.0
    %1457 = vmatpush1.msra.mxu0 %v183
    %1458 = vmatprep.subr.mxu0 0.0
    %1459 = vmatpush1.msra.mxu0 %v184
    %1460 = vmatprep.subr.mxu0 0.0
    %1461 = vmatpush1.msra.mxu0 %v185
    %1462 = vmatprep.subr.mxu0 0.0
    %1463 = vmatpush1.msra.mxu0 %v186
    %1464 = vmatprep.subr.mxu0 0.0
    %1465 = vmatpush1.msra.mxu0 %v187
    %1466 = vmatprep.subr.mxu0 0.0
    %1467 = vmatpush1.msra.mxu0 %v188
    %1468 = vmatprep.subr.mxu0 0.0
    %1469 = vmatpush1.msra.mxu0 %v189
    %1470 = vmatprep.subr.mxu0 0.0
    %1471 = vmatpush1.msra.mxu0 %v190
    %1472 = vmatprep.subr.mxu0 0.0
    %1473 = vmatpush1.msra.mxu0 %v191
    %1474 = vmatprep.subr.mxu0 0.0
    %1475 = vmatpush1.msra.mxu0 %v192
    %1476 = vmatprep.subr.mxu0 0.0
    %1477 = vmatpush1.msra.mxu0 %v193
    %1478 = vmatprep.subr.mxu0 0.0
    %1479 = vmatpush1.msra.mxu0 %v194
    %1480 = vmatprep.subr.mxu0 0.0
    %1481 = vmatpush1.msra.mxu0 %v195
    %1482 = vmatprep.subr.mxu0 0.0
    %1483 = vmatpush1.msra.mxu0 0.0
    %1484 = vmatprep.subr.mxu0 0.0
    %1485 = vmatpush1.msra.mxu0 0.0
    %1486 = vmatprep.subr.mxu0 0.0
    %1487 = vmatpush1.msra.mxu0 0.0
    %1488 = vmatprep.subr.mxu0 0.0
    %1489 = vmatpush1.msra.mxu0 0.0
    %1490 = vmatprep.subr.mxu0 0.0
    %1491 = vmatpush1.msra.mxu0 0.0
    %1492 = vmatprep.subr.mxu0 0.0
    %1493 = vmatpush1.msra.mxu0 0.0
    %1494 = vmatprep.subr.mxu0 0.0
    %1495 = vmatpush1.msra.mxu0 0.0
    %1496 = vmatprep.subr.mxu0 0.0
    %1497 = vmatpush1.msra.mxu0 0.0
    %1498 = vmatprep.subr.mxu0 0.0
    %1499 = vmatpush1.msra.mxu0 0.0
    %1500 = vmatprep.subr.mxu0 0.0
    %1501 = vmatpush1.msra.mxu0 0.0
    %1502 = vmatprep.subr.mxu0 0.0
    %1503 = vmatpush1.msra.mxu0 0.0
    %1504 = vmatprep.subr.mxu0 0.0
    %1505 = vmatpush1.msra.mxu0 0.0
    %1506 = vmatprep.subr.mxu0 0.0
    %1507 = vmatpush1.msra.mxu0 0.0
    %1508 = vmatprep.subr.mxu0 0.0
    %1509 = vmatpush1.msra.mxu0 0.0
    %1510 = vmatprep.subr.mxu0 0.0
    %1511 = vmatpush1.msra.mxu0 0.0
    %1512 = vmatprep.subr.mxu0 0.0
    %1513 = vmatpush1.msra.mxu0 0.0
    %1514 = vmatprep.mubr.f32.mxu0 0.0
    %1515 = vmatmul.mubr.f32.gmra.mrb[0].mxu0 %v1447
    %v1516 = vpop.f32.mrb[0].mxu0
    %v1517 = vadd.f32 0.0, %v1516
    %v1518 = vpop.f32.mrb[0].mxu0
    %1519 = vdwg.mxu0
    %v1520 = vsub.f32 %v1447, %v1517
    %v1521 = vmul.f32 %v1520, %v1520
    %1522 = vmatprep.subr.mxu0 0.0
    %1523 = vmatpush1.msra.mxu0 %v180
    %1524 = vmatprep.subr.mxu0 0.0
    %1525 = vmatpush1.msra.mxu0 %v181
    %1526 = vmatprep.subr.mxu0 0.0
    %1527 = vmatpush1.msra.mxu0 %v182
    %1528 = vmatprep.subr.mxu0 0.0
    %1529 = vmatpush1.msra.mxu0 %v183
    %1530 = vmatprep.subr.mxu0 0.0
    %1531 = vmatpush1.msra.mxu0 %v184
    %1532 = vmatprep.subr.mxu0 0.0
    %1533 = vmatpush1.msra.mxu0 %v185
    %1534 = vmatprep.subr.mxu0 0.0
    %1535 = vmatpush1.msra.mxu0 %v186
    %1536 = vmatprep.subr.mxu0 0.0
    %1537 = vmatpush1.msra.mxu0 %v187
    %1538 = vmatprep.subr.mxu0 0.0
    %1539 = vmatpush1.msra.mxu0 %v188
    %1540 = vmatprep.subr.mxu0 0.0
    %1541 = vmatpush1.msra.mxu0 %v189
    %1542 = vmatprep.subr.mxu0 0.0
    %1543 = vmatpush1.msra.mxu0 %v190
    %1544 = vmatprep.subr.mxu0 0.0
    %1545 = vmatpush1.msra.mxu0 %v191
    %1546 = vmatprep.subr.mxu0 0.0
    %1547 = vmatpush1.msra.mxu0 %v192
    %1548 = vmatprep.subr.mxu0 0.0
    %1549 = vmatpush1.msra.mxu0 %v193
    %1550 = vmatprep.subr.mxu0 0.0
    %1551 = vmatpush1.msra.mxu0 %v194
    %1552 = vmatprep.subr.mxu0 0.0
    %1553 = vmatpush1.msra.mxu0 %v195
    %1554 = vmatprep.subr.mxu0 0.0
    %1555 = vmatpush1.msra.mxu0 0.0
    %1556 = vmatprep.subr.mxu0 0.0
    %1557 = vmatpush1.msra.mxu0 0.0
    %1558 = vmatprep.subr.mxu0 0.0
    %1559 = vmatpush1.msra.mxu0 0.0
    %1560 = vmatprep.subr.mxu0 0.0
    %1561 = vmatpush1.msra.mxu0 0.0
    %1562 = vmatprep.subr.mxu0 0.0
    %1563 = vmatpush1.msra.mxu0 0.0
    %1564 = vmatprep.subr.mxu0 0.0
    %1565 = vmatpush1.msra.mxu0 0.0
    %1566 = vmatprep.subr.mxu0 0.0
    %1567 = vmatpush1.msra.mxu0 0.0
    %1568 = vmatprep.subr.mxu0 0.0
    %1569 = vmatpush1.msra.mxu0 0.0
    %1570 = vmatprep.subr.mxu0 0.0
    %1571 = vmatpush1.msra.mxu0 0.0
    %1572 = vmatprep.subr.mxu0 0.0
    %1573 = vmatpush1.msra.mxu0 0.0
    %1574 = vmatprep.subr.mxu0 0.0
    %1575 = vmatpush1.msra.mxu0 0.0
    %1576 = vmatprep.subr.mxu0 0.0
    %1577 = vmatpush1.msra.mxu0 0.0
    %1578 = vmatprep.subr.mxu0 0.0
    %1579 = vmatpush1.msra.mxu0 0.0
    %1580 = vmatprep.subr.mxu0 0.0
    %1581 = vmatpush1.msra.mxu0 0.0
    %1582 = vmatprep.subr.mxu0 0.0
    %1583 = vmatpush1.msra.mxu0 0.0
    %1584 = vmatprep.subr.mxu0 0.0
    %1585 = vmatpush1.msra.mxu0 0.0
    %1586 = vmatprep.mubr.f32.mxu0 0.0
    %1587 = vmatmul.mubr.f32.gmra.mrb[0].mxu0 %v1521
    %v1588 = vpop.f32.mrb[0].mxu0
    %v1589 = vadd.f32 1e-05, %v1588
    %v1590 = vpop.f32.mrb[0].mxu0
    %1591 = vdwg.mxu0
    %v1592 = vrsqrt.pop %v1589
    %v1593 = vmul.f32 %v1520, %v1592
    %v1595 = vlaneseq
    %v1596 = vshrl.u32 %v1595, 7
    %v1597 = vsub.s32 0, %v1596
    %v1598 = vrot.slane %v1448, %v1597
    %v1600 = vmul.f32 %v1593, %v1598
    %v1602 = vlaneseq
    %v1603 = vshrl.u32 %v1602, 7
    %v1604 = vsub.s32 0, %v1603
    %v1605 = vrot.slane %v1449, %v1604
    %v1607 = vadd.f32 %v1600, %v1605
    %v1608 = vld [vmem:[#allocation12] sm:$0xff]
    %v1609 = vld [vmem:[#allocation12 + $0x8] sm:$0xff]
    %v1610 = vld [vmem:[#allocation12 + $0x10] sm:$0xff]
    %v1611 = vld [vmem:[#allocation12 + $0x18] sm:$0xff]
    %v1612 = vld [vmem:[#allocation12 + $0x20] sm:$0xff]
    %v1613 = vld [vmem:[#allocation12 + $0x28] sm:$0xff]
    %v1614 = vld [vmem:[#allocation12 + $0x30] sm:$0xff]
    %v1615 = vld [vmem:[#allocation12 + $0x38] sm:$0xff]
    %v1616 = vld [vmem:[#allocation12 + $0x40] sm:$0xff]
    %v1617 = vld [vmem:[#allocation12 + $0x48] sm:$0xff]
    %v1618 = vld [vmem:[#allocation12 + $0x50] sm:$0xff]
    %v1619 = vld [vmem:[#allocation12 + $0x58] sm:$0xff]
    %v1620 = vld [vmem:[#allocation12 + $0x60] sm:$0xff]
    %v1621 = vld [vmem:[#allocation12 + $0x68] sm:$0xff]
    %v1622 = vld [vmem:[#allocation12 + $0x70] sm:$0xff]
    %v1623 = vld [vmem:[#allocation12 + $0x78] sm:$0xff]
    %v1624 = vld [vmem:[#allocation12 + $0x80] sm:$0xff]
    %v1625 = vld [vmem:[#allocation12 + $0x88] sm:$0xff]
    %v1626 = vld [vmem:[#allocation12 + $0x90] sm:$0xff]
    %v1627 = vld [vmem:[#allocation12 + $0x98] sm:$0xff]
    %v1628 = vld [vmem:[#allocation12 + $0xa0] sm:$0xff]
    %v1629 = vld [vmem:[#allocation12 + $0xa8] sm:$0xff]
    %v1630 = vld [vmem:[#allocation12 + $0xb0] sm:$0xff]
    %v1631 = vld [vmem:[#allocation12 + $0xb8] sm:$0xff]
    %v1632 = vld [vmem:[#allocation12 + $0xc0] sm:$0xff]
    %v1633 = vld [vmem:[#allocation12 + $0xc8] sm:$0xff]
    %v1634 = vld [vmem:[#allocation12 + $0xd0] sm:$0xff]
    %v1635 = vld [vmem:[#allocation12 + $0xd8] sm:$0xff]
    %v1636 = vld [vmem:[#allocation12 + $0xe0] sm:$0xff]
    %v1637 = vld [vmem:[#allocation12 + $0xe8] sm:$0xff]
    %v1638 = vld [vmem:[#allocation12 + $0xf0] sm:$0xff]
    %v1639 = vld [vmem:[#allocation12 + $0xf8] sm:$0xff]
    %v1640 = vld [vmem:[%s19] sm:$0x3]
    %v1642 = vlaneseq
    %v1643 = vshrl.u32 %v1642, 7
    %v1644 = vsub.s32 0, %v1643
    %v1645 = vrot.slane %v1640, %v1644
    %v1646 = vlaneseq
    %v1647 = vshrl.u32 %v1646, 7
    %v1648 = vsub.s32 1, %v1647
    %v1649 = vrot.slane %v1640, %v1648
    %1652 = vmatprep.subr.mxu0 %v1609
    %1653 = vmatpush1.msra.mxu0 %v1608
    %1654 = vmatprep.subr.mxu0 %v1611
    %1655 = vmatpush1.msra.mxu0 %v1610
    %1656 = vmatprep.subr.mxu0 %v1613
    %1657 = vmatpush1.msra.mxu0 %v1612
    %1658 = vmatprep.subr.mxu0 %v1615
    %1659 = vmatpush1.msra.mxu0 %v1614
    %1660 = vmatprep.subr.mxu0 %v1617
    %1661 = vmatpush1.msra.mxu0 %v1616
    %1662 = vmatprep.subr.mxu0 %v1619
    %1663 = vmatpush1.msra.mxu0 %v1618
    %1664 = vmatprep.subr.mxu0 %v1621
    %1665 = vmatpush1.msra.mxu0 %v1620
    %1666 = vmatprep.subr.mxu0 %v1623
    %1667 = vmatpush1.msra.mxu0 %v1622
    %1668 = vmatprep.subr.mxu0 %v1625
    %1669 = vmatpush1.msra.mxu0 %v1624
    %1670 = vmatprep.subr.mxu0 %v1627
    %1671 = vmatpush1.msra.mxu0 %v1626
    %1672 = vmatprep.subr.mxu0 %v1629
    %1673 = vmatpush1.msra.mxu0 %v1628
    %1674 = vmatprep.subr.mxu0 %v1631
    %1675 = vmatpush1.msra.mxu0 %v1630
    %1676 = vmatprep.subr.mxu0 %v1633
    %1677 = vmatpush1.msra.mxu0 %v1632
    %1678 = vmatprep.subr.mxu0 %v1635
    %1679 = vmatpush1.msra.mxu0 %v1634
    %1680 = vmatprep.subr.mxu0 %v1637
    %1681 = vmatpush1.msra.mxu0 %v1636
    %1682 = vmatprep.subr.mxu0 %v1639
    %1683 = vmatpush1.msra.mxu0 %v1638
    %1684 = vmatprep.subr.mxu0 0.0
    %1685 = vmatpush1.msra.mxu0 0.0
    %1686 = vmatprep.subr.mxu0 0.0
    %1687 = vmatpush1.msra.mxu0 0.0
    %1688 = vmatprep.subr.mxu0 0.0
    %1689 = vmatpush1.msra.mxu0 0.0
    %1690 = vmatprep.subr.mxu0 0.0
    %1691 = vmatpush1.msra.mxu0 0.0
    %1692 = vmatprep.subr.mxu0 0.0
    %1693 = vmatpush1.msra.mxu0 0.0
    %1694 = vmatprep.subr.mxu0 0.0
    %1695 = vmatpush1.msra.mxu0 0.0
    %1696 = vmatprep.subr.mxu0 0.0
    %1697 = vmatpush1.msra.mxu0 0.0
    %1698 = vmatprep.subr.mxu0 0.0
    %1699 = vmatpush1.msra.mxu0 0.0
    %1700 = vmatprep.subr.mxu0 0.0
    %1701 = vmatpush1.msra.mxu0 0.0
    %1702 = vmatprep.subr.mxu0 0.0
    %1703 = vmatpush1.msra.mxu0 0.0
    %1704 = vmatprep.subr.mxu0 0.0
    %1705 = vmatpush1.msra.mxu0 0.0
    %1706 = vmatprep.subr.mxu0 0.0
    %1707 = vmatpush1.msra.mxu0 0.0
    %1708 = vmatprep.subr.mxu0 0.0
    %1709 = vmatpush1.msra.mxu0 0.0
    %1710 = vmatprep.subr.mxu0 0.0
    %1711 = vmatpush1.msra.mxu0 0.0
    %1712 = vmatprep.subr.mxu0 0.0
    %1713 = vmatpush1.msra.mxu0 0.0
    %1714 = vmatprep.subr.mxu0 0.0
    %1715 = vmatpush1.msra.mxu0 0.0
    %1716 = vmatprep.mubr.f32.mxu0 0.0
    %1717 = vmatmul.mubr.f32.gmra.mrb[0].mxu0 %v1607
    %v1718 = vpop.f32.mrb[0].mxu0
    %v1719 = vadd.f32 %v1645, %v1718
    %v1720 = vpop.f32.mrb[0].mxu0
    %v1721 = vadd.f32 %v1649, %v1720
    %1722 = vdwg.mxu0
    %vm1723 = vcmp.ge.f32.partialorder %v1719, 0.0
    %vm1724 = vcmp.ge.f32.partialorder %v1721, 0.0
    %v1725 = vmul.f32 %v1719, 0.01
    %v1726 = vmul.f32 %v1721, 0.01
    %v1727 = vsel %vm1723, %v1719, %v1725
    %v1728 = vsel %vm1724, %v1721, %v1726
    %v1729 = vld [vmem:[#allocation13] sm:$0xff]
    %v1730 = vld [vmem:[#allocation13 + $0x8] sm:$0xff]
    %v1731 = vld [vmem:[#allocation13 + $0x10] sm:$0xff]
    %v1732 = vld [vmem:[#allocation13 + $0x18] sm:$0xff]
    %v1733 = vld [vmem:[#allocation13 + $0x20] sm:$0xff]
    %v1734 = vld [vmem:[#allocation13 + $0x28] sm:$0xff]
    %v1735 = vld [vmem:[#allocation13 + $0x30] sm:$0xff]
    %v1736 = vld [vmem:[#allocation13 + $0x38] sm:$0xff]
    %v1737 = vld [vmem:[#allocation13 + $0x40] sm:$0xff]
    %v1738 = vld [vmem:[#allocation13 + $0x48] sm:$0xff]
    %v1739 = vld [vmem:[#allocation13 + $0x50] sm:$0xff]
    %v1740 = vld [vmem:[#allocation13 + $0x58] sm:$0xff]
    %v1741 = vld [vmem:[#allocation13 + $0x60] sm:$0xff]
    %v1742 = vld [vmem:[#allocation13 + $0x68] sm:$0xff]
    %v1743 = vld [vmem:[#allocation13 + $0x70] sm:$0xff]
    %v1744 = vld [vmem:[#allocation13 + $0x78] sm:$0xff]
    %v1745 = vld [vmem:[#allocation13 + $0x80] sm:$0xff]
    %v1746 = vld [vmem:[#allocation13 + $0x88] sm:$0xff]
    %v1747 = vld [vmem:[#allocation13 + $0x90] sm:$0xff]
    %v1748 = vld [vmem:[#allocation13 + $0x98] sm:$0xff]
    %v1749 = vld [vmem:[#allocation13 + $0xa0] sm:$0xff]
    %v1750 = vld [vmem:[#allocation13 + $0xa8] sm:$0xff]
    %v1751 = vld [vmem:[#allocation13 + $0xb0] sm:$0xff]
    %v1752 = vld [vmem:[#allocation13 + $0xb8] sm:$0xff]
    %v1753 = vld [vmem:[#allocation13 + $0xc0] sm:$0xff]
    %v1754 = vld [vmem:[#allocation13 + $0xc8] sm:$0xff]
    %v1755 = vld [vmem:[#allocation13 + $0xd0] sm:$0xff]
    %v1756 = vld [vmem:[#allocation13 + $0xd8] sm:$0xff]
    %v1757 = vld [vmem:[#allocation13 + $0xe0] sm:$0xff]
    %v1758 = vld [vmem:[#allocation13 + $0xe8] sm:$0xff]
    %v1759 = vld [vmem:[#allocation13 + $0xf0] sm:$0xff]
    %v1760 = vld [vmem:[#allocation13 + $0xf8] sm:$0xff]
    %v1761 = vld [vmem:[%s21] sm:$0x1]
    %v1763 = vlaneseq
    %v1764 = vshrl.u32 %v1763, 7
    %v1765 = vsub.s32 0, %v1764
    %v1766 = vrot.slane %v1761, %v1765
    %1768 = vmatprep.subr.mxu0 0.0
    %1769 = vmatpush1.msra.mxu0 %v1729
    %1770 = vmatprep.subr.mxu0 0.0
    %1771 = vmatpush1.msra.mxu0 %v1730
    %1772 = vmatprep.subr.mxu0 0.0
    %1773 = vmatpush1.msra.mxu0 %v1731
    %1774 = vmatprep.subr.mxu0 0.0
    %1775 = vmatpush1.msra.mxu0 %v1732
    %1776 = vmatprep.subr.mxu0 0.0
    %1777 = vmatpush1.msra.mxu0 %v1733
    %1778 = vmatprep.subr.mxu0 0.0
    %1779 = vmatpush1.msra.mxu0 %v1734
    %1780 = vmatprep.subr.mxu0 0.0
    %1781 = vmatpush1.msra.mxu0 %v1735
    %1782 = vmatprep.subr.mxu0 0.0
    %1783 = vmatpush1.msra.mxu0 %v1736
    %1784 = vmatprep.subr.mxu0 0.0
    %1785 = vmatpush1.msra.mxu0 %v1737
    %1786 = vmatprep.subr.mxu0 0.0
    %1787 = vmatpush1.msra.mxu0 %v1738
    %1788 = vmatprep.subr.mxu0 0.0
    %1789 = vmatpush1.msra.mxu0 %v1739
    %1790 = vmatprep.subr.mxu0 0.0
    %1791 = vmatpush1.msra.mxu0 %v1740
    %1792 = vmatprep.subr.mxu0 0.0
    %1793 = vmatpush1.msra.mxu0 %v1741
    %1794 = vmatprep.subr.mxu0 0.0
    %1795 = vmatpush1.msra.mxu0 %v1742
    %1796 = vmatprep.subr.mxu0 0.0
    %1797 = vmatpush1.msra.mxu0 %v1743
    %1798 = vmatprep.subr.mxu0 0.0
    %1799 = vmatpush1.msra.mxu0 %v1744
    %1800 = vmatprep.subr.mxu0 0.0
    %1801 = vmatpush1.msra.mxu0 %v1745
    %1802 = vmatprep.subr.mxu0 0.0
    %1803 = vmatpush1.msra.mxu0 %v1746
    %1804 = vmatprep.subr.mxu0 0.0
    %1805 = vmatpush1.msra.mxu0 %v1747
    %1806 = vmatprep.subr.mxu0 0.0
    %1807 = vmatpush1.msra.mxu0 %v1748
    %1808 = vmatprep.subr.mxu0 0.0
    %1809 = vmatpush1.msra.mxu0 %v1749
    %1810 = vmatprep.subr.mxu0 0.0
    %1811 = vmatpush1.msra.mxu0 %v1750
    %1812 = vmatprep.subr.mxu0 0.0
    %1813 = vmatpush1.msra.mxu0 %v1751
    %1814 = vmatprep.subr.mxu0 0.0
    %1815 = vmatpush1.msra.mxu0 %v1752
    %1816 = vmatprep.subr.mxu0 0.0
    %1817 = vmatpush1.msra.mxu0 %v1753
    %1818 = vmatprep.subr.mxu0 0.0
    %1819 = vmatpush1.msra.mxu0 %v1754
    %1820 = vmatprep.subr.mxu0 0.0
    %1821 = vmatpush1.msra.mxu0 %v1755
    %1822 = vmatprep.subr.mxu0 0.0
    %1823 = vmatpush1.msra.mxu0 %v1756
    %1824 = vmatprep.subr.mxu0 0.0
    %1825 = vmatpush1.msra.mxu0 %v1757
    %1826 = vmatprep.subr.mxu0 0.0
    %1827 = vmatpush1.msra.mxu0 %v1758
    %1828 = vmatprep.subr.mxu0 0.0
    %1829 = vmatpush1.msra.mxu0 %v1759
    %1830 = vmatprep.subr.mxu0 0.0
    %1831 = vmatpush1.msra.mxu0 %v1760
    %1832 = vmatprep.mubr.f32.mxu0 %v1728
    %1833 = vmatmul.mubr.f32.gmra.mrb[0].mxu0 %v1727
    %v1834 = vpop.f32.mrb[0].mxu0
    %v1835 = vadd.f32 %v1766, %v1834
    %v1836 = vpop.f32.mrb[0].mxu0
    %1837 = vdwg.mxu0
    %vm1838 = vcmask 254976
    %1839 = vst.msk [vmem:[%s22] sm:$0x3] %vm1838, %v1835
    // Predicated region
    $region122: #{_lambda_.1} parent=1 // pred_check
      _
    $region123: #{_lambda_.1} parent=1 // pred_check_branch
      %1841 = sbr.rel (0) target = $region125
    $region124: #{_lambda_.1} parent=1 // pred_region
      _
    $region125: #{_lambda_.1} parent=1 // pred_fallthru
      _
    // Predicated region
    $region126: #{_lambda_.1} parent=1 // pred_check
      _
    $region127: #{_lambda_.1} parent=1 // pred_check_branch
      %1843 = sbr.rel (0) target = $region129
    $region128: #{_lambda_.1} parent=1 // pred_region
      _
    $region129: #{_lambda_.1} parent=1 // pred_fallthru
      _
    %1844 = vsyncpa [#allocation3], 1
    %1845 = vsyncpa [#allocation5], 1
    %1846 = vsyncpa [#allocation8], 1
    %1847 = vsyncpa [#allocation11], 1
    %1848 = vsyncpa [#allocation14], 1

</llo_original>
